<compile_context>
chip_gen: v5e
topology: v5e:2x2
jax: 0.10.0
libtpu: 0.0.40
codegen_flags: <defaults>
</compile_context>

<pallas_src>
import numpy as np
import jax
import jax.numpy as jnp
from jax import lax
from jax.experimental import pallas as pl
from jax.experimental.pallas import tpu as pltpu


# ---------------------------------------------------------------------------
# Single fused kernel (one batch tile per grid step)
# ---------------------------------------------------------------------------
def _lenet_fused_kernel(x_ref, t1_ref, b1_ref, sel1_ref, t2_ref, b2_ref,
                        sel2_ref, w1_ref, fb1_ref, w2_ref, fb2_ref,
                        w3_ref, fb3_ref, o_ref):
    f32 = jnp.float32
    bf16 = jnp.bfloat16

    # ---- conv1 (1->6, 3x3, VALID): one K-packed Toeplitz matmul (K=128) ----
    xw = x_ref[...]                                               # (32*bt,128) bf16
    acc1 = jnp.dot(xw, t1_ref[...], preferred_element_type=f32)   # (32*bt,256)
    y1 = jnp.maximum(acc1 + b1_ref[...], 0.0)
    # 2x2 max-pool: even/odd W outputs live in separate 128-lane halves (one
    # aligned max); H pairs via pltpu.roll (row r vs r+1) -- no sublane slices.
    p1 = jnp.maximum(y1[:, :128], y1[:, 128:])                    # (32*bt,128)
    n1 = p1.shape[0]
    h1m = jnp.maximum(p1, pltpu.roll(p1, shift=n1 - 1, axis=0))   # max(r, r+1)
    a1 = jnp.dot(sel1_ref[...], h1m.astype(bf16),
                 preferred_element_type=f32)                      # (16*bt,128)

    # ---- conv2 (6->16, 3x3, VALID): K-packed into a single K=384 matmul ----
    n2 = a1.shape[0]
    a1w = jnp.concatenate(
        [a1,
         pltpu.roll(a1, shift=n2 - 1, axis=0),                    # rows r+1
         pltpu.roll(a1, shift=n2 - 2, axis=0)],                   # rows r+2
        axis=1).astype(bf16)                                      # (16*bt,384)
    acc2 = jnp.dot(a1w, t2_ref[...], preferred_element_type=f32)  # (16*bt,256)
    y2 = jnp.maximum(acc2 + b2_ref[...], 0.0)
    p2 = jnp.maximum(y2[:, :128], y2[:, 128:])                    # (16*bt,128)
    h2m = jnp.maximum(p2, pltpu.roll(p2, shift=n2 - 1, axis=0)).astype(bf16)

    # ---- flatten (C,H,W): 6 row-selection matmuls -> aligned lane concat ----
    a768 = jnp.concatenate(
        [jnp.dot(sel2_ref[hp], h2m, preferred_element_type=f32)
         for hp in range(6)], axis=1).astype(bf16)                # (bt,768)

    # ---- fc1 (K=768, one matmul) -> fc2 -> fc3 ----
    h = jnp.maximum(jnp.dot(a768, w1_ref[...], preferred_element_type=f32)
                    + fb1_ref[...], 0.0)                          # (bt,120)
    h = jnp.maximum(jnp.dot(h.astype(bf16), w2_ref[...],
                            preferred_element_type=f32) + fb2_ref[...], 0.0)
    o_ref[...] = jnp.dot(h.astype(bf16), w3_ref[...],
                         preferred_element_type=f32) + fb3_ref[...]   # (bt,128)


# ---------------------------------------------------------------------------
# One-time parameter re-layout (outside the forward path)
# ---------------------------------------------------------------------------
def prepare_params(p, bt):
    w1 = np.asarray(p["conv1_w"], np.float32)      # (6, 1, 3, 3)
    b1 = np.asarray(p["conv1_b"], np.float32)
    w2 = np.asarray(p["conv2_w"], np.float32)      # (16, 6, 3, 3)
    b2 = np.asarray(p["conv2_b"], np.float32)
    f1w = np.asarray(p["fc1_w"], np.float32)       # (120, 576)
    f1b = np.asarray(p["fc1_b"], np.float32)
    f2w = np.asarray(p["fc2_w"], np.float32)       # (84, 120)
    f2b = np.asarray(p["fc2_b"], np.float32)
    f3w = np.asarray(p["fc3_w"], np.float32)       # (10, 84)
    f3b = np.asarray(p["fc3_b"], np.float32)

    wp1 = np.arange(15)      # pooled-width index, layer 1
    wp2 = np.arange(6)       # pooled-width index, layer 2

    # conv1 Toeplitz over the packed K: input lane = kh*32 + w_in,
    # output lane = par*128 + c*15 + wp  (w_out = 2*wp + par).
    t1 = np.zeros((128, 256), np.float32)
    for c in range(6):
        for kh in range(3):
            for kw in range(3):
                for par in range(2):
                    t1[kh * 32 + 2 * wp1 + par + kw,
                       par * 128 + c * 15 + wp1] = w1[c, 0, kh, kw]
    b1r = np.zeros((1, 256), np.float32)
    for c in range(6):
        for par in range(2):
            b1r[0, par * 128 + c * 15 + wp1] = b1[c]

    # conv2 Toeplitz over packed K: input lane = kh*128 + c1*15 + w_in,
    # output lane = par*128 + c2*6 + wp.
    t2 = np.zeros((384, 256), np.float32)
    for c2 in range(16):
        for c1 in range(6):
            for kh in range(3):
                for kw in range(3):
                    for par in range(2):
                        t2[kh * 128 + c1 * 15 + 2 * wp2 + par + kw,
                           par * 128 + c2 * 6 + wp2] = w2[c2, c1, kh, kw]
    b2r = np.zeros((1, 256), np.float32)
    for c2 in range(16):
        for par in range(2):
            b2r[0, par * 128 + c2 * 6 + wp2] = b2[c2]

    # H-pool row selection, layer 1: h1m row b*32+2*hp -> a1 row b*16+hp
    # (row b*16+15 stays zero so the stage-2 layout is 16 rows / image).
    sel1 = np.zeros((16 * bt, 32 * bt), np.float32)
    for b in range(bt):
        for hp in range(15):
            sel1[b * 16 + hp, b * 32 + 2 * hp] = 1.0
    # H-pool + flatten gather, layer 2: h2m row b*16+2*hp -> (b, hp) block.
    sel2 = np.zeros((6, bt, 16 * bt), np.float32)
    for hp in range(6):
        for b in range(bt):
            sel2[hp, b, b * 16 + 2 * hp] = 1.0
    # Guard the garbage-row assumption: selected rows must be valid conv/pool
    # rows (never a batch-seam / roll-wrap row).
    assert sel1.sum() == 15 * bt and sel2.sum() == 6 * bt
    assert (np.nonzero(sel1)[1] % 32).max() <= 28      # pair max uses rows <= 29
    assert (np.nonzero(sel2.reshape(6 * bt, -1))[1] % 16).max() <= 10  # <= 11

    # fc1 weight, lane-concatenated: K index = hp*128 + c2*6 + wp, absorbing
    # torch's (C,H,W) flatten order.
    w1cat = np.zeros((768, 120), np.float32)
    for hp in range(6):
        for c2 in range(16):
            w1cat[hp * 128 + c2 * 6 + wp2, :] = f1w[:, c2 * 36 + hp * 6 + wp2].T

    # fc3 weight / bias padded to a lane-dense 128-wide output block.
    w3p = np.zeros((84, 128), np.float32)
    w3p[:, :10] = f3w.T
    fb3p = np.zeros((1, 128), np.float32)
    fb3p[0, :10] = f3b

    bf = jnp.bfloat16
    return dict(
        t1=jnp.asarray(t1, dtype=bf), b1r=jnp.asarray(b1r),
        sel1=jnp.asarray(sel1, dtype=bf),
        t2=jnp.asarray(t2, dtype=bf), b2r=jnp.asarray(b2r),
        sel2=jnp.asarray(sel2, dtype=bf),
        w1cat=jnp.asarray(w1cat, dtype=bf), fb1=jnp.asarray(f1b.reshape(1, -1)),
        w2=jnp.asarray(np.ascontiguousarray(f2w.T), dtype=bf),
        fb2=jnp.asarray(f2b.reshape(1, -1)),
        w3=jnp.asarray(w3p, dtype=bf), fb3=jnp.asarray(fb3p))


# ---------------------------------------------------------------------------
# Forward pass: tiny wrapper prep + one pallas_call over a batch-tiled grid
# ---------------------------------------------------------------------------
def lenet_forward(x_nchw, prep):
    B = x_nchw.shape[0]
    bt = prep["sel1"].shape[0] // 16            # batch tile baked into sel1/sel2
    assert B % bt == 0, (B, bt)

    # K-pack conv1's kh taps once, outside the kernel (tiny array, XLA-fused):
    # lanes [0,32)=x[r], [32,64)=x[r+1], [64,96)=x[r+2], [96,128)=0.
    x2d = x_nchw.reshape(B * 32, 32).astype(jnp.float32)
    xw = jnp.concatenate(
        [x2d, jnp.roll(x2d, -1, axis=0), jnp.roll(x2d, -2, axis=0),
         jnp.zeros_like(x2d)], axis=1).astype(jnp.bfloat16)        # (32B, 128)

    def wspec(a):
        # Full-array block with a constant index_map: stays VMEM-resident
        # across grid steps (no per-step re-DMA of weights).
        return pl.BlockSpec(a.shape, lambda i, _n=a.ndim: (0,) * _n)

    out = pl.pallas_call(
        _lenet_fused_kernel,
        out_shape=jax.ShapeDtypeStruct((B, 128), jnp.float32),
        grid=(B // bt,),
        in_specs=[pl.BlockSpec((32 * bt, 128), lambda i: (i, 0)),
                  wspec(prep["t1"]), wspec(prep["b1r"]), wspec(prep["sel1"]),
                  wspec(prep["t2"]), wspec(prep["b2r"]), wspec(prep["sel2"]),
                  wspec(prep["w1cat"]), wspec(prep["fb1"]), wspec(prep["w2"]),
                  wspec(prep["fb2"]), wspec(prep["w3"]), wspec(prep["fb3"])],
        out_specs=pl.BlockSpec((bt, 128), lambda i: (i, 0)),
        compiler_params=pltpu.CompilerParams(
            dimension_semantics=("parallel",)),
    )(xw, prep["t1"], prep["b1r"], prep["sel1"], prep["t2"], prep["b2r"],
      prep["sel2"], prep["w1cat"], prep["fb1"], prep["w2"], prep["fb2"],
      prep["w3"], prep["fb3"])
    return out[:, :10]


# Pure-JAX reference matching the PyTorch module semantics (NCHW throughout).
def reference_forward(x, p):
    def conv(z, w, b):
        z = lax.conv_general_dilated(z, w, (1, 1), "VALID",
                                     dimension_numbers=("NCHW", "OIHW", "NCHW"))
        return jnp.maximum(z + b[None, :, None, None], 0.0)

    def pool(z):
        return lax.reduce_window(z, -jnp.inf, lax.max,
                                 (1, 1, 2, 2), (1, 1, 2, 2), "VALID")

    y = pool(conv(x, p["conv1_w"], p["conv1_b"]))
    y = pool(conv(y, p["conv2_w"], p["conv2_b"]))
    flat = y.reshape(y.shape[0], -1)
    h = jnp.maximum(flat @ p["fc1_w"].T + p["fc1_b"], 0.0)
    h = jnp.maximum(h @ p["fc2_w"].T + p["fc2_b"], 0.0)
    return h @ p["fc3_w"].T + p["fc3_b"]


if __name__ == "__main__":
    B = 2
    key = jax.random.PRNGKey(0)
    ks = jax.random.split(key, 12)
    x = jax.random.normal(ks[0], (B, 1, 32, 32), jnp.float32)
    p = {
        "conv1_w": jax.random.normal(ks[1], (6, 1, 3, 3), jnp.float32) * 0.30,
        "conv1_b": jax.random.normal(ks[2], (6,), jnp.float32) * 0.10,
        "conv2_w": jax.random.normal(ks[3], (16, 6, 3, 3), jnp.float32) * 0.10,
        "conv2_b": jax.random.normal(ks[4], (16,), jnp.float32) * 0.10,
        "fc1_w": jax.random.normal(ks[5], (120, 576), jnp.float32) * 0.05,
        "fc1_b": jax.random.normal(ks[6], (120,), jnp.float32) * 0.05,
        "fc2_w": jax.random.normal(ks[7], (84, 120), jnp.float32) * 0.05,
        "fc2_b": jax.random.normal(ks[8], (84,), jnp.float32) * 0.05,
        "fc3_w": jax.random.normal(ks[9], (10, 84), jnp.float32) * 0.05,
        "fc3_b": jax.random.normal(ks[10], (10,), jnp.float32) * 0.05,
    }

    prep = prepare_params(p, bt=B)              # one-time weight re-layout
    fwd = jax.jit(lenet_forward)

    out = jax.block_until_ready(fwd(x, prep))
    assert out.shape == (B, 10), out.shape

    ref = jax.block_until_ready(reference_forward(x, p))
    # bf16 matmul operands (intentional: kernel is weight-DMA bound) give
    # ~0.5-1% relative error vs the f32 reference; tolerance reflects that.
    err = float(jnp.max(jnp.abs(out - ref)))
    assert bool(jnp.allclose(out, ref, atol=3e-2, rtol=3e-2)), (
        "Pallas output does not match reference", err)

    print("KERNEL_OK")
</pallas_src>

<mosaic_0001>
module attributes {stable_mosaic.version = 11 : i64} {
  func.func @_lenet_fused_kernel(%arg0: i32, %arg1: memref<64x128xbf16, #tpu.memory_space<vmem>>, %arg2: memref<128x256xbf16, #tpu.memory_space<vmem>>, %arg3: memref<1x256xf32, #tpu.memory_space<vmem>>, %arg4: memref<32x64xbf16, #tpu.memory_space<vmem>>, %arg5: memref<384x256xbf16, #tpu.memory_space<vmem>>, %arg6: memref<1x256xf32, #tpu.memory_space<vmem>>, %arg7: memref<6x2x32xbf16, #tpu.memory_space<vmem>>, %arg8: memref<768x120xbf16, #tpu.memory_space<vmem>>, %arg9: memref<1x120xf32, #tpu.memory_space<vmem>>, %arg10: memref<120x84xbf16, #tpu.memory_space<vmem>>, %arg11: memref<1x84xf32, #tpu.memory_space<vmem>>, %arg12: memref<84x128xbf16, #tpu.memory_space<vmem>>, %arg13: memref<1x128xf32, #tpu.memory_space<vmem>>, %arg14: memref<2x128xf32, #tpu.memory_space<vmem>>) attributes {dimension_semantics = [#tpu.dimension_semantics<parallel>], iteration_bounds = array<i64: 1>, scalar_prefetch = 0 : i64, scratch_operands = 0 : i64, tpu.core_type = #tpu.core_type<tc>, window_params = [{transform_indices = @transform_0, window_bounds = array<i64: 64, 128>}, {pipeline_mode = #tpu.pipeline_mode<synchronous>, transform_indices = @transform_1, window_bounds = array<i64: 128, 256>}, {pipeline_mode = #tpu.pipeline_mode<synchronous>, transform_indices = @transform_2, window_bounds = array<i64: 1, 256>}, {pipeline_mode = #tpu.pipeline_mode<synchronous>, transform_indices = @transform_3, window_bounds = array<i64: 32, 64>}, {pipeline_mode = #tpu.pipeline_mode<synchronous>, transform_indices = @transform_4, window_bounds = array<i64: 384, 256>}, {pipeline_mode = #tpu.pipeline_mode<synchronous>, transform_indices = @transform_5, window_bounds = array<i64: 1, 256>}, {pipeline_mode = #tpu.pipeline_mode<synchronous>, transform_indices = @transform_6, window_bounds = array<i64: 6, 2, 32>}, {pipeline_mode = #tpu.pipeline_mode<synchronous>, transform_indices = @transform_7, window_bounds = array<i64: 768, 120>}, {pipeline_mode = #tpu.pipeline_mode<synchronous>, transform_indices = @transform_8, window_bounds = array<i64: 1, 120>}, {pipeline_mode = #tpu.pipeline_mode<synchronous>, transform_indices = @transform_9, window_bounds = array<i64: 120, 84>}, {pipeline_mode = #tpu.pipeline_mode<synchronous>, transform_indices = @transform_10, window_bounds = array<i64: 1, 84>}, {pipeline_mode = #tpu.pipeline_mode<synchronous>, transform_indices = @transform_11, window_bounds = array<i64: 84, 128>}, {pipeline_mode = #tpu.pipeline_mode<synchronous>, transform_indices = @transform_12, window_bounds = array<i64: 1, 128>}, {transform_indices = @transform_13, window_bounds = array<i64: 2, 128>}]} {
    %c0 = arith.constant 0 : index
    %c0_0 = arith.constant 0 : index
    %0 = vector.load %arg1[%c0, %c0_0] : memref<64x128xbf16, #tpu.memory_space<vmem>>, vector<64x128xbf16>
    %c0_1 = arith.constant 0 : index
    %c0_2 = arith.constant 0 : index
    %1 = vector.load %arg2[%c0_1, %c0_2] : memref<128x256xbf16, #tpu.memory_space<vmem>>, vector<128x256xbf16>
    %cst = arith.constant dense<0.000000e+00> : vector<64x256xf32>
    %2 = tpu.matmul %0, %1, %cst {dimension_numbers = #tpu.dot_dimension_numbers<[1], [0], [0], [1], [0, 0, 1, 1], [], []>} : vector<64x128xbf16>, vector<128x256xbf16>, vector<64x256xf32> -> vector<64x256xf32>
    %c0_3 = arith.constant 0 : index
    %c0_4 = arith.constant 0 : index
    %3 = vector.load %arg3[%c0_3, %c0_4] : memref<1x256xf32, #tpu.memory_space<vmem>>, vector<1x256xf32>
    %4 = vector.broadcast %3 : vector<1x256xf32> to vector<64x256xf32>
    %5 = arith.addf %2, %4 : vector<64x256xf32>
    %cst_5 = arith.constant 0.000000e+00 : f32
    %6 = vector.broadcast %cst_5 : f32 to vector<64x256xf32>
    %7 = arith.maximumf %5, %6 : vector<64x256xf32>
    %8 = vector.extract_strided_slice %7 {offsets = [0, 0], sizes = [64, 128], strides = [1, 1]} : vector<64x256xf32> to vector<64x128xf32>
    %9 = vector.extract_strided_slice %7 {offsets = [0, 128], sizes = [64, 128], strides = [1, 1]} : vector<64x256xf32> to vector<64x128xf32>
    %10 = arith.maximumf %8, %9 : vector<64x128xf32>
    %c63_i32 = arith.constant 63 : i32
    %11 = tpu.dynamic_rotate %10 by %c63_i32 dim 0 : vector<64x128xf32>, i32 -> vector<64x128xf32>
    %12 = arith.maximumf %10, %11 : vector<64x128xf32>
    %c0_6 = arith.constant 0 : index
    %c0_7 = arith.constant 0 : index
    %13 = vector.load %arg4[%c0_6, %c0_7] : memref<32x64xbf16, #tpu.memory_space<vmem>>, vector<32x64xbf16>
    %14 = arith.truncf %12 : vector<64x128xf32> to vector<64x128xbf16>
    %cst_8 = arith.constant dense<0.000000e+00> : vector<32x128xf32>
    %15 = tpu.matmul %13, %14, %cst_8 {dimension_numbers = #tpu.dot_dimension_numbers<[1], [0], [0], [1], [0, 0, 1, 1], [], []>} : vector<32x64xbf16>, vector<64x128xbf16>, vector<32x128xf32> -> vector<32x128xf32>
    %c31_i32 = arith.constant 31 : i32
    %16 = tpu.dynamic_rotate %15 by %c31_i32 dim 0 : vector<32x128xf32>, i32 -> vector<32x128xf32>
    %c30_i32 = arith.constant 30 : i32
    %17 = tpu.dynamic_rotate %15 by %c30_i32 dim 0 : vector<32x128xf32>, i32 -> vector<32x128xf32>
    %18 = tpu.concatenate %15, %16, %17 in 1 : vector<32x128xf32>, vector<32x128xf32>, vector<32x128xf32> -> vector<32x384xf32>
    %19 = arith.truncf %18 : vector<32x384xf32> to vector<32x384xbf16>
    %c0_9 = arith.constant 0 : index
    %c0_10 = arith.constant 0 : index
    %20 = vector.load %arg5[%c0_9, %c0_10] : memref<384x256xbf16, #tpu.memory_space<vmem>>, vector<384x256xbf16>
    %cst_11 = arith.constant dense<0.000000e+00> : vector<32x256xf32>
    %21 = tpu.matmul %19, %20, %cst_11 {dimension_numbers = #tpu.dot_dimension_numbers<[1], [0], [0], [1], [0, 0, 1, 1], [], []>} : vector<32x384xbf16>, vector<384x256xbf16>, vector<32x256xf32> -> vector<32x256xf32>
    %c0_12 = arith.constant 0 : index
    %c0_13 = arith.constant 0 : index
    %22 = vector.load %arg6[%c0_12, %c0_13] : memref<1x256xf32, #tpu.memory_space<vmem>>, vector<1x256xf32>
    %23 = vector.broadcast %22 : vector<1x256xf32> to vector<32x256xf32>
    %24 = arith.addf %21, %23 : vector<32x256xf32>
    %cst_14 = arith.constant 0.000000e+00 : f32
    %25 = vector.broadcast %cst_14 : f32 to vector<32x256xf32>
    %26 = arith.maximumf %24, %25 : vector<32x256xf32>
    %27 = vector.extract_strided_slice %26 {offsets = [0, 0], sizes = [32, 128], strides = [1, 1]} : vector<32x256xf32> to vector<32x128xf32>
    %28 = vector.extract_strided_slice %26 {offsets = [0, 128], sizes = [32, 128], strides = [1, 1]} : vector<32x256xf32> to vector<32x128xf32>
    %29 = arith.maximumf %27, %28 : vector<32x128xf32>
    %c31_i32_15 = arith.constant 31 : i32
    %30 = tpu.dynamic_rotate %29 by %c31_i32_15 dim 0 : vector<32x128xf32>, i32 -> vector<32x128xf32>
    %31 = arith.maximumf %29, %30 : vector<32x128xf32>
    %32 = arith.truncf %31 : vector<32x128xf32> to vector<32x128xbf16>
    %c0_16 = arith.constant 0 : index
    %c0_17 = arith.constant 0 : index
    %c0_18 = arith.constant 0 : index
    %33 = vector.load %arg7[%c0_16, %c0_17, %c0_18] : memref<6x2x32xbf16, #tpu.memory_space<vmem>>, vector<1x2x32xbf16>
    %34 = vector.shape_cast %33 : vector<1x2x32xbf16> to vector<2x32xbf16>
    %cst_19 = arith.constant dense<0.000000e+00> : vector<2x128xf32>
    %35 = tpu.matmul %34, %32, %cst_19 {dimension_numbers = #tpu.dot_dimension_numbers<[1], [0], [0], [1], [0, 0, 1, 1], [], []>} : vector<2x32xbf16>, vector<32x128xbf16>, vector<2x128xf32> -> vector<2x128xf32>
    %c1 = arith.constant 1 : index
    %c0_20 = arith.constant 0 : index
    %c0_21 = arith.constant 0 : index
    %36 = vector.load %arg7[%c1, %c0_20, %c0_21] : memref<6x2x32xbf16, #tpu.memory_space<vmem>>, vector<1x2x32xbf16>
    %37 = vector.shape_cast %36 : vector<1x2x32xbf16> to vector<2x32xbf16>
    %cst_22 = arith.constant dense<0.000000e+00> : vector<2x128xf32>
    %38 = tpu.matmul %37, %32, %cst_22 {dimension_numbers = #tpu.dot_dimension_numbers<[1], [0], [0], [1], [0, 0, 1, 1], [], []>} : vector<2x32xbf16>, vector<32x128xbf16>, vector<2x128xf32> -> vector<2x128xf32>
    %c2 = arith.constant 2 : index
    %c0_23 = arith.constant 0 : index
    %c0_24 = arith.constant 0 : index
    %39 = vector.load %arg7[%c2, %c0_23, %c0_24] : memref<6x2x32xbf16, #tpu.memory_space<vmem>>, vector<1x2x32xbf16>
    %40 = vector.shape_cast %39 : vector<1x2x32xbf16> to vector<2x32xbf16>
    %cst_25 = arith.constant dense<0.000000e+00> : vector<2x128xf32>
    %41 = tpu.matmul %40, %32, %cst_25 {dimension_numbers = #tpu.dot_dimension_numbers<[1], [0], [0], [1], [0, 0, 1, 1], [], []>} : vector<2x32xbf16>, vector<32x128xbf16>, vector<2x128xf32> -> vector<2x128xf32>
    %c3 = arith.constant 3 : index
    %c0_26 = arith.constant 0 : index
    %c0_27 = arith.constant 0 : index
    %42 = vector.load %arg7[%c3, %c0_26, %c0_27] : memref<6x2x32xbf16, #tpu.memory_space<vmem>>, vector<1x2x32xbf16>
    %43 = vector.shape_cast %42 : vector<1x2x32xbf16> to vector<2x32xbf16>
    %cst_28 = arith.constant dense<0.000000e+00> : vector<2x128xf32>
    %44 = tpu.matmul %43, %32, %cst_28 {dimension_numbers = #tpu.dot_dimension_numbers<[1], [0], [0], [1], [0, 0, 1, 1], [], []>} : vector<2x32xbf16>, vector<32x128xbf16>, vector<2x128xf32> -> vector<2x128xf32>
    %c4 = arith.constant 4 : index
    %c0_29 = arith.constant 0 : index
    %c0_30 = arith.constant 0 : index
    %45 = vector.load %arg7[%c4, %c0_29, %c0_30] : memref<6x2x32xbf16, #tpu.memory_space<vmem>>, vector<1x2x32xbf16>
    %46 = vector.shape_cast %45 : vector<1x2x32xbf16> to vector<2x32xbf16>
    %cst_31 = arith.constant dense<0.000000e+00> : vector<2x128xf32>
    %47 = tpu.matmul %46, %32, %cst_31 {dimension_numbers = #tpu.dot_dimension_numbers<[1], [0], [0], [1], [0, 0, 1, 1], [], []>} : vector<2x32xbf16>, vector<32x128xbf16>, vector<2x128xf32> -> vector<2x128xf32>
    %c5 = arith.constant 5 : index
    %c0_32 = arith.constant 0 : index
    %c0_33 = arith.constant 0 : index
    %48 = vector.load %arg7[%c5, %c0_32, %c0_33] : memref<6x2x32xbf16, #tpu.memory_space<vmem>>, vector<1x2x32xbf16>
    %49 = vector.shape_cast %48 : vector<1x2x32xbf16> to vector<2x32xbf16>
    %cst_34 = arith.constant dense<0.000000e+00> : vector<2x128xf32>
    %50 = tpu.matmul %49, %32, %cst_34 {dimension_numbers = #tpu.dot_dimension_numbers<[1], [0], [0], [1], [0, 0, 1, 1], [], []>} : vector<2x32xbf16>, vector<32x128xbf16>, vector<2x128xf32> -> vector<2x128xf32>
    %51 = tpu.concatenate %35, %38, %41, %44, %47, %50 in 1 : vector<2x128xf32>, vector<2x128xf32>, vector<2x128xf32>, vector<2x128xf32>, vector<2x128xf32>, vector<2x128xf32> -> vector<2x768xf32>
    %52 = arith.truncf %51 : vector<2x768xf32> to vector<2x768xbf16>
    %c0_35 = arith.constant 0 : index
    %c0_36 = arith.constant 0 : index
    %53 = vector.load %arg8[%c0_35, %c0_36] : memref<768x120xbf16, #tpu.memory_space<vmem>>, vector<768x120xbf16>
    %cst_37 = arith.constant dense<0.000000e+00> : vector<2x120xf32>
    %54 = tpu.matmul %52, %53, %cst_37 {dimension_numbers = #tpu.dot_dimension_numbers<[1], [0], [0], [1], [0, 0, 1, 1], [], []>} : vector<2x768xbf16>, vector<768x120xbf16>, vector<2x120xf32> -> vector<2x120xf32>
    %c0_38 = arith.constant 0 : index
    %c0_39 = arith.constant 0 : index
    %55 = vector.load %arg9[%c0_38, %c0_39] : memref<1x120xf32, #tpu.memory_space<vmem>>, vector<1x120xf32>
    %56 = vector.broadcast %55 : vector<1x120xf32> to vector<2x120xf32>
    %57 = arith.addf %54, %56 : vector<2x120xf32>
    %cst_40 = arith.constant 0.000000e+00 : f32
    %58 = vector.broadcast %cst_40 : f32 to vector<2x120xf32>
    %59 = arith.maximumf %57, %58 : vector<2x120xf32>
    %60 = arith.truncf %59 : vector<2x120xf32> to vector<2x120xbf16>
    %c0_41 = arith.constant 0 : index
    %c0_42 = arith.constant 0 : index
    %61 = vector.load %arg10[%c0_41, %c0_42] : memref<120x84xbf16, #tpu.memory_space<vmem>>, vector<120x84xbf16>
    %cst_43 = arith.constant dense<0.000000e+00> : vector<2x84xf32>
    %62 = tpu.matmul %60, %61, %cst_43 {dimension_numbers = #tpu.dot_dimension_numbers<[1], [0], [0], [1], [0, 0, 1, 1], [], []>} : vector<2x120xbf16>, vector<120x84xbf16>, vector<2x84xf32> -> vector<2x84xf32>
    %c0_44 = arith.constant 0 : index
    %c0_45 = arith.constant 0 : index
    %63 = vector.load %arg11[%c0_44, %c0_45] : memref<1x84xf32, #tpu.memory_space<vmem>>, vector<1x84xf32>
    %64 = vector.broadcast %63 : vector<1x84xf32> to vector<2x84xf32>
    %65 = arith.addf %62, %64 : vector<2x84xf32>
    %cst_46 = arith.constant 0.000000e+00 : f32
    %66 = vector.broadcast %cst_46 : f32 to vector<2x84xf32>
    %67 = arith.maximumf %65, %66 : vector<2x84xf32>
    %68 = arith.truncf %67 : vector<2x84xf32> to vector<2x84xbf16>
    %c0_47 = arith.constant 0 : index
    %c0_48 = arith.constant 0 : index
    %69 = vector.load %arg12[%c0_47, %c0_48] : memref<84x128xbf16, #tpu.memory_space<vmem>>, vector<84x128xbf16>
    %cst_49 = arith.constant dense<0.000000e+00> : vector<2x128xf32>
    %70 = tpu.matmul %68, %69, %cst_49 {dimension_numbers = #tpu.dot_dimension_numbers<[1], [0], [0], [1], [0, 0, 1, 1], [], []>} : vector<2x84xbf16>, vector<84x128xbf16>, vector<2x128xf32> -> vector<2x128xf32>
    %c0_50 = arith.constant 0 : index
    %c0_51 = arith.constant 0 : index
    %71 = vector.load %arg13[%c0_50, %c0_51] : memref<1x128xf32, #tpu.memory_space<vmem>>, vector<1x128xf32>
    %72 = vector.broadcast %71 : vector<1x128xf32> to vector<2x128xf32>
    %73 = arith.addf %70, %72 : vector<2x128xf32>
    %c0_52 = arith.constant 0 : index
    %c0_53 = arith.constant 0 : index
    %74 = vector.load %arg14[%c0_52, %c0_53] : memref<2x128xf32, #tpu.memory_space<vmem>>, vector<2x128xf32>
    tpu.vector_store %arg14[%c0_52, %c0_53], %73 {strides = array<i32>} : memref<2x128xf32, #tpu.memory_space<vmem>>, vector<2x128xf32>,
    return
  }
  func.func @transform_0(%arg0: i32) -> (i32, i32) {
    %c0_i32 = arith.constant 0 : i32
    %c0_i32_0 = arith.constant 0 : i32
    return %arg0, %c0_i32 : i32, i32
  }
  func.func @transform_1(%arg0: i32) -> (i32, i32) {
    %c0_i32 = arith.constant 0 : i32
    %c0_i32_0 = arith.constant 0 : i32
    %c0_i32_1 = arith.constant 0 : i32
    return %c0_i32, %c0_i32_0 : i32, i32
  }
  func.func @transform_2(%arg0: i32) -> (i32, i32) {
    %c0_i32 = arith.constant 0 : i32
    %c0_i32_0 = arith.constant 0 : i32
    %c0_i32_1 = arith.constant 0 : i32
    return %c0_i32, %c0_i32_0 : i32, i32
  }
  func.func @transform_3(%arg0: i32) -> (i32, i32) {
    %c0_i32 = arith.constant 0 : i32
    %c0_i32_0 = arith.constant 0 : i32
    %c0_i32_1 = arith.constant 0 : i32
    return %c0_i32, %c0_i32_0 : i32, i32
  }
  func.func @transform_4(%arg0: i32) -> (i32, i32) {
    %c0_i32 = arith.constant 0 : i32
    %c0_i32_0 = arith.constant 0 : i32
    %c0_i32_1 = arith.constant 0 : i32
    return %c0_i32, %c0_i32_0 : i32, i32
  }
  func.func @transform_5(%arg0: i32) -> (i32, i32) {
    %c0_i32 = arith.constant 0 : i32
    %c0_i32_0 = arith.constant 0 : i32
    %c0_i32_1 = arith.constant 0 : i32
    return %c0_i32, %c0_i32_0 : i32, i32
  }
  func.func @transform_6(%arg0: i32) -> (i32, i32, i32) {
    %c0_i32 = arith.constant 0 : i32
    %c0_i32_0 = arith.constant 0 : i32
    %c0_i32_1 = arith.constant 0 : i32
    %c0_i32_2 = arith.constant 0 : i32
    return %c0_i32, %c0_i32_0, %c0_i32_1 : i32, i32, i32
  }
  func.func @transform_7(%arg0: i32) -> (i32, i32) {
    %c0_i32 = arith.constant 0 : i32
    %c0_i32_0 = arith.constant 0 : i32
    %c0_i32_1 = arith.constant 0 : i32
    return %c0_i32, %c0_i32_0 : i32, i32
  }
  func.func @transform_8(%arg0: i32) -> (i32, i32) {
    %c0_i32 = arith.constant 0 : i32
    %c0_i32_0 = arith.constant 0 : i32
    %c0_i32_1 = arith.constant 0 : i32
    return %c0_i32, %c0_i32_0 : i32, i32
  }
  func.func @transform_9(%arg0: i32) -> (i32, i32) {
    %c0_i32 = arith.constant 0 : i32
    %c0_i32_0 = arith.constant 0 : i32
    %c0_i32_1 = arith.constant 0 : i32
    return %c0_i32, %c0_i32_0 : i32, i32
  }
  func.func @transform_10(%arg0: i32) -> (i32, i32) {
    %c0_i32 = arith.constant 0 : i32
    %c0_i32_0 = arith.constant 0 : i32
    %c0_i32_1 = arith.constant 0 : i32
    return %c0_i32, %c0_i32_0 : i32, i32
  }
  func.func @transform_11(%arg0: i32) -> (i32, i32) {
    %c0_i32 = arith.constant 0 : i32
    %c0_i32_0 = arith.constant 0 : i32
    %c0_i32_1 = arith.constant 0 : i32
    return %c0_i32, %c0_i32_0 : i32, i32
  }
  func.func @transform_12(%arg0: i32) -> (i32, i32) {
    %c0_i32 = arith.constant 0 : i32
    %c0_i32_0 = arith.constant 0 : i32
    %c0_i32_1 = arith.constant 0 : i32
    return %c0_i32, %c0_i32_0 : i32, i32
  }
  func.func @transform_13(%arg0: i32) -> (i32, i32) {
    %c0_i32 = arith.constant 0 : i32
    %c0_i32_0 = arith.constant 0 : i32
    return %arg0, %c0_i32 : i32, i32
  }
}

</mosaic_0001>

<llo_original>
// kernel: lenet_forward.1
$region0: #{lenet_forward.1}
  #allocation0 [shape = 'u32[]', space=smem, size = 0x4, offset = 0x4, fixed_abs, tag = 'smem constant byte address 0x4 - core index']
  #allocation1 [shape = 'u32[72,128]{1,0:T(1,128)}', space=vmem, size = 0x9000, scoped, tag = 'internal scratch']
  %s0 = inlined_call_operand.vmem [shape: bf16[64,128], index: 0, kind: input, shape index: {}]
  %s1 = inlined_call_operand.vmem [shape: bf16[128,256], index: 1, kind: input, shape index: {}]
  %s2 = inlined_call_operand.vmem [shape: f32[1,256], index: 2, kind: input, shape index: {}]
  %s3 = inlined_call_operand.vmem [shape: bf16[32,64], index: 3, kind: input, shape index: {}]
  %s4 = inlined_call_operand.vmem [shape: bf16[384,256], index: 4, kind: input, shape index: {}]
  %s5 = inlined_call_operand.vmem [shape: f32[1,256], index: 5, kind: input, shape index: {}]
  %s6 = inlined_call_operand.vmem [shape: bf16[6,2,32], index: 6, kind: input, shape index: {}]
  %s7 = inlined_call_operand.vmem [shape: bf16[768,120], index: 7, kind: input, shape index: {}]
  %s8 = inlined_call_operand.vmem [shape: f32[1,120], index: 8, kind: input, shape index: {}]
  %s9 = inlined_call_operand.vmem [shape: bf16[120,84], index: 9, kind: input, shape index: {}]
  %s10 = inlined_call_operand.vmem [shape: f32[1,84], index: 10, kind: input, shape index: {}]
  %s11 = inlined_call_operand.vmem [shape: bf16[84,128], index: 11, kind: input, shape index: {}]
  %s12 = inlined_call_operand.vmem [shape: f32[1,128], index: 12, kind: input, shape index: {}]
  %s13 = inlined_call_operand.hbm [shape: f32[2,128], index: 13, kind: output, shape index: {}]
  %s14 = sld [smem:[#allocation0]]
  $region62: #{lenet_forward.1} parent=0
    _
  %s16 = ssub.s32 1, %s14
  %s17 = scalar_select 0, %s16, %s14
  $region1: #{lenet_forward.1} parent=0
    #allocation2 [shape = 'u8[1024]{0}', space=vmem, size = 0x400, scoped, tag = 'output window, operand 0, single buffered']
    #allocation3 [shape = 's32[1]{0}', space=sflag, size = 0x4, scoped, tag = 'scoped memory for lenet_forward.1']
    %18 = vsyncpa [#allocation3], 0
    // Predicated region
    $region2: #{lenet_forward.1} parent=1 // pred_check
      _
    $region3: #{lenet_forward.1} parent=1 // pred_check_branch
      %20 = sbr.rel (0) target = $region5
    $region4: #{lenet_forward.1} parent=1 // pred_region
      _
    $region5: #{lenet_forward.1} parent=1 // pred_fallthru
      _
    // Predicated region
    $region6: #{lenet_forward.1} parent=1 // pred_check
      _
    $region7: #{lenet_forward.1} parent=1 // pred_check_branch
      %22 = sbr.rel (0) target = $region9
    $region8: #{lenet_forward.1} parent=1 // pred_region
      _
    $region9: #{lenet_forward.1} parent=1 // pred_fallthru
      _
    // Predicated region
    $region10: #{lenet_forward.1} parent=1 // pred_check
      _
    $region11: #{lenet_forward.1} parent=1 // pred_check_branch
      %24 = sbr.rel (0) target = $region13
    $region12: #{lenet_forward.1} parent=1 // pred_region
      _
    $region13: #{lenet_forward.1} parent=1 // pred_fallthru
      _
    // Predicated region
    $region14: #{lenet_forward.1} parent=1 // pred_check
      _
    $region15: #{lenet_forward.1} parent=1 // pred_check_branch
      %26 = sbr.rel (0) target = $region17
    $region16: #{lenet_forward.1} parent=1 // pred_region
      _
    $region17: #{lenet_forward.1} parent=1 // pred_fallthru
      _
    // Predicated region
    $region18: #{lenet_forward.1} parent=1 // pred_check
      _
    $region19: #{lenet_forward.1} parent=1 // pred_check_branch
      %28 = sbr.rel (0) target = $region21
    $region20: #{lenet_forward.1} parent=1 // pred_region
      _
    $region21: #{lenet_forward.1} parent=1 // pred_fallthru
      _
    // Predicated region
    $region22: #{lenet_forward.1} parent=1 // pred_check
      _
    $region23: #{lenet_forward.1} parent=1 // pred_check_branch
      %30 = sbr.rel (0) target = $region25
    $region24: #{lenet_forward.1} parent=1 // pred_region
      _
    $region25: #{lenet_forward.1} parent=1 // pred_fallthru
      _
    // Predicated region
    $region26: #{lenet_forward.1} parent=1 // pred_check
      _
    $region27: #{lenet_forward.1} parent=1 // pred_check_branch
      %32 = sbr.rel (0) target = $region29
    $region28: #{lenet_forward.1} parent=1 // pred_region
      _
    $region29: #{lenet_forward.1} parent=1 // pred_fallthru
      _
    // Predicated region
    $region30: #{lenet_forward.1} parent=1 // pred_check
      _
    $region31: #{lenet_forward.1} parent=1 // pred_check_branch
      %34 = sbr.rel (0) target = $region33
    $region32: #{lenet_forward.1} parent=1 // pred_region
      _
    $region33: #{lenet_forward.1} parent=1 // pred_fallthru
      _
    // Predicated region
    $region34: #{lenet_forward.1} parent=1 // pred_check
      _
    $region35: #{lenet_forward.1} parent=1 // pred_check_branch
      %36 = sbr.rel (0) target = $region37
    $region36: #{lenet_forward.1} parent=1 // pred_region
      _
    $region37: #{lenet_forward.1} parent=1 // pred_fallthru
      _
    // Predicated region
    $region38: #{lenet_forward.1} parent=1 // pred_check
      _
    $region39: #{lenet_forward.1} parent=1 // pred_check_branch
      %38 = sbr.rel (0) target = $region41
    $region40: #{lenet_forward.1} parent=1 // pred_region
      _
    $region41: #{lenet_forward.1} parent=1 // pred_fallthru
      _
    // Predicated region
    $region42: #{lenet_forward.1} parent=1 // pred_check
      _
    $region43: #{lenet_forward.1} parent=1 // pred_check_branch
      %40 = sbr.rel (0) target = $region45
    $region44: #{lenet_forward.1} parent=1 // pred_region
      _
    $region45: #{lenet_forward.1} parent=1 // pred_fallthru
      _
    // Predicated region
    $region46: #{lenet_forward.1} parent=1 // pred_check
      _
    $region47: #{lenet_forward.1} parent=1 // pred_check_branch
      %42 = sbr.rel (0) target = $region49
    $region48: #{lenet_forward.1} parent=1 // pred_region
      _
    $region49: #{lenet_forward.1} parent=1 // pred_fallthru
      _
    // Predicated region
    $region50: #{lenet_forward.1} parent=1 // pred_check
      _
    $region51: #{lenet_forward.1} parent=1 // pred_check_branch
      %44 = sbr.rel (0) target = $region53
    $region52: #{lenet_forward.1} parent=1 // pred_region
      _
    $region53: #{lenet_forward.1} parent=1 // pred_fallthru
      _
    %v46 = vld [vmem:[%s0] sm:$0xf]
    %v47 = vld [vmem:[%s0 + $0x4] sm:$0xf]
    %v48 = vld [vmem:[%s0 + $0x8] sm:$0xf]
    %v49 = vld [vmem:[%s0 + $0xc] sm:$0xf]
    %v50 = vld [vmem:[%s0 + $0x10] sm:$0xf]
    %v51 = vld [vmem:[%s0 + $0x14] sm:$0xf]
    %v52 = vld [vmem:[%s0 + $0x18] sm:$0xf]
    %v53 = vld [vmem:[%s0 + $0x1c] sm:$0xf]
    %v54 = vld [vmem:[%s1] sm:$0xff]
    %v55 = vld [vmem:[%s1 + $0x8] sm:$0xff]
    %v56 = vld [vmem:[%s1 + $0x10] sm:$0xff]
    %v57 = vld [vmem:[%s1 + $0x18] sm:$0xff]
    %v58 = vld [vmem:[%s1 + $0x20] sm:$0xff]
    %v59 = vld [vmem:[%s1 + $0x28] sm:$0xff]
    %v60 = vld [vmem:[%s1 + $0x30] sm:$0xff]
    %v61 = vld [vmem:[%s1 + $0x38] sm:$0xff]
    %v62 = vld [vmem:[%s1 + $0x40] sm:$0xff]
    %v63 = vld [vmem:[%s1 + $0x48] sm:$0xff]
    %v64 = vld [vmem:[%s1 + $0x50] sm:$0xff]
    %v65 = vld [vmem:[%s1 + $0x58] sm:$0xff]
    %v66 = vld [vmem:[%s1 + $0x60] sm:$0xff]
    %v67 = vld [vmem:[%s1 + $0x68] sm:$0xff]
    %v68 = vld [vmem:[%s1 + $0x70] sm:$0xff]
    %v69 = vld [vmem:[%s1 + $0x78] sm:$0xff]
    %v70 = vld [vmem:[%s2] sm:$0x3]
    %v72 = vperm.slane %v70, 0
    %v73 = vperm.slane %v70, 1
    %v84 = vunpack.c.l.b16 %v46
    %v85 = vunpack.c.l.b16 %v47
    %v86 = vunpack.c.l.b16 %v48
    %v87 = vunpack.c.l.b16 %v49
    %v88 = vunpack.c.l.b16 %v50
    %v89 = vunpack.c.l.b16 %v51
    %v90 = vunpack.c.l.b16 %v52
    %v91 = vunpack.c.l.b16 %v53
    %v92 = vpack.c.b16 %v85, %v84
    %v93 = vpack.c.b16 %v87, %v86
    %v94 = vpack.c.b16 %v89, %v88
    %v95 = vpack.c.b16 %v91, %v90
    %v116 = vunpack.c.l.b16 %v54
    %v117 = vunpack.c.h.b16 %v54
    %v118 = vunpack.c.l.b16 %v55
    %v119 = vunpack.c.h.b16 %v55
    %v120 = vunpack.c.l.b16 %v56
    %v121 = vunpack.c.h.b16 %v56
    %v122 = vunpack.c.l.b16 %v57
    %v123 = vunpack.c.h.b16 %v57
    %v124 = vunpack.c.l.b16 %v58
    %v125 = vunpack.c.h.b16 %v58
    %v126 = vunpack.c.l.b16 %v59
    %v127 = vunpack.c.h.b16 %v59
    %v128 = vunpack.c.l.b16 %v60
    %v129 = vunpack.c.h.b16 %v60
    %v130 = vunpack.c.l.b16 %v61
    %v131 = vunpack.c.h.b16 %v61
    %v132 = vunpack.c.l.b16 %v62
    %v133 = vunpack.c.h.b16 %v62
    %v134 = vunpack.c.l.b16 %v63
    %v135 = vunpack.c.h.b16 %v63
    %v136 = vunpack.c.l.b16 %v64
    %v137 = vunpack.c.h.b16 %v64
    %v138 = vunpack.c.l.b16 %v65
    %v139 = vunpack.c.h.b16 %v65
    %v140 = vunpack.c.l.b16 %v66
    %v141 = vunpack.c.h.b16 %v66
    %v142 = vunpack.c.l.b16 %v67
    %v143 = vunpack.c.h.b16 %v67
    %v144 = vunpack.c.l.b16 %v68
    %v145 = vunpack.c.h.b16 %v68
    %v146 = vunpack.c.l.b16 %v69
    %v147 = vunpack.c.h.b16 %v69
    %v148 = vpack.c.b16 %v118, %v116
    %v149 = vpack.c.b16 %v119, %v117
    %v150 = vpack.c.b16 %v122, %v120
    %v151 = vpack.c.b16 %v123, %v121
    %v152 = vpack.c.b16 %v126, %v124
    %v153 = vpack.c.b16 %v127, %v125
    %v154 = vpack.c.b16 %v130, %v128
    %v155 = vpack.c.b16 %v131, %v129
    %v156 = vpack.c.b16 %v134, %v132
    %v157 = vpack.c.b16 %v135, %v133
    %v158 = vpack.c.b16 %v138, %v136
    %v159 = vpack.c.b16 %v139, %v137
    %v160 = vpack.c.b16 %v142, %v140
    %v161 = vpack.c.b16 %v143, %v141
    %v162 = vpack.c.b16 %v146, %v144
    %v163 = vpack.c.b16 %v147, %v145
    %180 = vmatpush.bf16.msra.mxu0 %v162
    %181 = vmatpush.bf16.msra.mxu0 %v160
    %182 = vmatpush.bf16.msra.mxu0 %v158
    %183 = vmatpush.bf16.msra.mxu0 %v156
    %184 = vmatpush.bf16.msra.mxu0 %v154
    %185 = vmatpush.bf16.msra.mxu0 %v152
    %186 = vmatpush.bf16.msra.mxu0 %v150
    %187 = vmatpush.bf16.msra.mxu0 %v148
    %188 = vmatmul.bf16.gmra.mxu0 %v92
    %v189 = vpop.f32.mrf.mxu0
    %v190 = vadd.f32 %v72, %v189
    %v191 = vpop.f32.mrf.mxu0
    %v192 = vadd.f32 %v72, %v191
    %193 = vmatmul.bf16.gmra.mxu0 %v93
    %v194 = vpop.f32.mrf.mxu0
    %v195 = vadd.f32 %v72, %v194
    %v196 = vpop.f32.mrf.mxu0
    %v197 = vadd.f32 %v72, %v196
    %198 = vmatmul.bf16.gmra.mxu0 %v94
    %v199 = vpop.f32.mrf.mxu0
    %v200 = vadd.f32 %v72, %v199
    %v201 = vpop.f32.mrf.mxu0
    %v202 = vadd.f32 %v72, %v201
    %203 = vmatmul.bf16.gmra.mxu0 %v95
    %v204 = vpop.f32.mrf.mxu0
    %v205 = vadd.f32 %v72, %v204
    %v206 = vpop.f32.mrf.mxu0
    %v207 = vadd.f32 %v72, %v206
    %208 = vdwg.mxu0
    %209 = vmatpush.bf16.msra.mxu0 %v163
    %210 = vmatpush.bf16.msra.mxu0 %v161
    %211 = vmatpush.bf16.msra.mxu0 %v159
    %212 = vmatpush.bf16.msra.mxu0 %v157
    %213 = vmatpush.bf16.msra.mxu0 %v155
    %214 = vmatpush.bf16.msra.mxu0 %v153
    %215 = vmatpush.bf16.msra.mxu0 %v151
    %216 = vmatpush.bf16.msra.mxu0 %v149
    %217 = vmatmul.bf16.gmra.mxu0 %v92
    %v218 = vpop.f32.mrf.mxu0
    %v219 = vadd.f32 %v73, %v218
    %v220 = vpop.f32.mrf.mxu0
    %v221 = vadd.f32 %v73, %v220
    %222 = vmatmul.bf16.gmra.mxu0 %v93
    %v223 = vpop.f32.mrf.mxu0
    %v224 = vadd.f32 %v73, %v223
    %v225 = vpop.f32.mrf.mxu0
    %v226 = vadd.f32 %v73, %v225
    %227 = vmatmul.bf16.gmra.mxu0 %v94
    %v228 = vpop.f32.mrf.mxu0
    %v229 = vadd.f32 %v73, %v228
    %v230 = vpop.f32.mrf.mxu0
    %v231 = vadd.f32 %v73, %v230
    %232 = vmatmul.bf16.gmra.mxu0 %v95
    %v233 = vpop.f32.mrf.mxu0
    %v234 = vadd.f32 %v73, %v233
    %v235 = vpop.f32.mrf.mxu0
    %v236 = vadd.f32 %v73, %v235
    %237 = vdwg.mxu0
    %v238 = vmax.f32 %v190, 0.0
    %v239 = vmax.f32 %v219, 0.0
    %v240 = vmax.f32 %v192, 0.0
    %v241 = vmax.f32 %v221, 0.0
    %v242 = vmax.f32 %v195, 0.0
    %v243 = vmax.f32 %v224, 0.0
    %v244 = vmax.f32 %v197, 0.0
    %v245 = vmax.f32 %v226, 0.0
    %v246 = vmax.f32 %v200, 0.0
    %v247 = vmax.f32 %v229, 0.0
    %v248 = vmax.f32 %v202, 0.0
    %v249 = vmax.f32 %v231, 0.0
    %v250 = vmax.f32 %v205, 0.0
    %v251 = vmax.f32 %v234, 0.0
    %v252 = vmax.f32 %v207, 0.0
    %v253 = vmax.f32 %v236, 0.0
    %v254 = vmax.f32 %v238, %v239
    %v255 = vmax.f32 %v240, %v241
    %v256 = vmax.f32 %v242, %v243
    %v257 = vmax.f32 %v244, %v245
    %v258 = vmax.f32 %v246, %v247
    %v259 = vmax.f32 %v248, %v249
    %v260 = vmax.f32 %v250, %v251
    %v261 = vmax.f32 %v252, %v253
    %v262 = vrot.slane %v254, 1
    %v263 = vrot.slane %v255, 1
    %v264 = vrot.slane %v256, 1
    %v265 = vrot.slane %v257, 1
    %v266 = vrot.slane %v258, 1
    %v267 = vrot.slane %v259, 1
    %v268 = vrot.slane %v260, 1
    %v269 = vrot.slane %v261, 1
    %v270 = vlaneseq
    %v271 = vshrl.u32 %v270, 7
    %vm272 = vcmp.lt.s32.totalorder %v271, 7
    %v273 = vsel %vm272, %v268, %v269
    %v274 = vsel %vm272, %v267, %v268
    %v275 = vsel %vm272, %v266, %v267
    %v276 = vsel %vm272, %v265, %v266
    %v277 = vsel %vm272, %v264, %v265
    %v278 = vsel %vm272, %v263, %v264
    %v279 = vsel %vm272, %v262, %v263
    %v280 = vsel %vm272, %v269, %v262
    %v281 = vmax.f32 %v254, %v279
    %v282 = vmax.f32 %v255, %v278
    %v283 = vmax.f32 %v256, %v277
    %v284 = vmax.f32 %v257, %v276
    %v285 = vmax.f32 %v258, %v275
    %v286 = vmax.f32 %v259, %v274
    %v287 = vmax.f32 %v260, %v273
    %v288 = vmax.f32 %v261, %v280
    %v289 = vld [vmem:[%s3] sm:$0xf]
    %v290 = vld [vmem:[%s3 + $0x4] sm:$0xf]
    %v291 = vld [vmem:[%s3 + $0x8] sm:$0xf]
    %v292 = vld [vmem:[%s3 + $0xc] sm:$0xf]
    %v293 = vpack.c.bf16 %v282, %v281
    %v294 = vpack.c.bf16 %v284, %v283
    %v295 = vpack.c.bf16 %v286, %v285
    %v296 = vpack.c.bf16 %v288, %v287
    %v301 = vunpack.c.l.b16 %v289
    %v302 = vunpack.c.l.b16 %v290
    %v303 = vunpack.c.l.b16 %v291
    %v304 = vunpack.c.l.b16 %v292
    %v305 = vpack.c.b16 %v302, %v301
    %v306 = vpack.c.b16 %v304, %v303
    %vm307 = vcmask 523264
    %v309 = vsel %vm307, %v305, 0
    %v312 = vsel %vm307, %v306, 0
    %314 = vmatpush.bf16.msra.mxu0 0
    %315 = vmatpush.bf16.msra.mxu0 0
    %316 = vmatpush.bf16.msra.mxu0 0
    %317 = vmatpush.bf16.msra.mxu0 0
    %318 = vmatpush.bf16.msra.mxu0 %v296
    %319 = vmatpush.bf16.msra.mxu0 %v295
    %320 = vmatpush.bf16.msra.mxu0 %v294
    %321 = vmatpush.bf16.msra.mxu0 %v293
    %322 = vmatmul.bf16.gmra.mxu0 %v309
    %v323 = vpop.f32.mrf.mxu0
    %v324 = vadd.f32 0.0, %v323
    %v325 = vpop.f32.mrf.mxu0
    %v326 = vadd.f32 0.0, %v325
    %327 = vmatmul.bf16.gmra.mxu0 %v312
    %v328 = vpop.f32.mrf.mxu0
    %v329 = vadd.f32 0.0, %v328
    %v330 = vpop.f32.mrf.mxu0
    %v331 = vadd.f32 0.0, %v330
    %332 = vdwg.mxu0
    %v333 = vrot.slane %v324, 1
    %v334 = vrot.slane %v326, 1
    %v335 = vrot.slane %v329, 1
    %v336 = vrot.slane %v331, 1
    %v337 = vsel %vm272, %v335, %v336
    %v338 = vsel %vm272, %v334, %v335
    %v339 = vsel %vm272, %v333, %v334
    %v340 = vsel %vm272, %v336, %v333
    %v341 = vrot.slane %v324, 2
    %v342 = vrot.slane %v326, 2
    %v343 = vrot.slane %v329, 2
    %v344 = vrot.slane %v331, 2
    %vm345 = vcmp.lt.s32.totalorder %v271, 6
    %v346 = vsel %vm345, %v343, %v344
    %v347 = vsel %vm345, %v342, %v343
    %v348 = vsel %vm345, %v341, %v342
    %v349 = vsel %vm345, %v344, %v341
    %v350 = vpack.c.bf16 %v326, %v324
    %v351 = vpack.c.bf16 %v338, %v339
    %v352 = vpack.c.bf16 %v347, %v348
    %v353 = vpack.c.bf16 %v331, %v329
    %v354 = vpack.c.bf16 %v340, %v337
    %v355 = vpack.c.bf16 %v349, %v346
    %v356 = vld [vmem:[%s4] sm:$0xff]
    %v357 = vld [vmem:[%s4 + $0x8] sm:$0xff]
    %v358 = vld [vmem:[%s4 + $0x10] sm:$0xff]
    %v359 = vld [vmem:[%s4 + $0x18] sm:$0xff]
    %v360 = vld [vmem:[%s4 + $0x20] sm:$0xff]
    %v361 = vld [vmem:[%s4 + $0x28] sm:$0xff]
    %v362 = vld [vmem:[%s4 + $0x30] sm:$0xff]
    %v363 = vld [vmem:[%s4 + $0x38] sm:$0xff]
    %v364 = vld [vmem:[%s4 + $0x40] sm:$0xff]
    %v365 = vld [vmem:[%s4 + $0x48] sm:$0xff]
    %v366 = vld [vmem:[%s4 + $0x50] sm:$0xff]
    %v367 = vld [vmem:[%s4 + $0x58] sm:$0xff]
    %v368 = vld [vmem:[%s4 + $0x60] sm:$0xff]
    %v369 = vld [vmem:[%s4 + $0x68] sm:$0xff]
    %v370 = vld [vmem:[%s4 + $0x70] sm:$0xff]
    %v371 = vld [vmem:[%s4 + $0x78] sm:$0xff]
    %v372 = vld [vmem:[%s4 + $0x80] sm:$0xff]
    %v373 = vld [vmem:[%s4 + $0x88] sm:$0xff]
    %v374 = vld [vmem:[%s4 + $0x90] sm:$0xff]
    %v375 = vld [vmem:[%s4 + $0x98] sm:$0xff]
    %v376 = vld [vmem:[%s4 + $0xa0] sm:$0xff]
    %v377 = vld [vmem:[%s4 + $0xa8] sm:$0xff]
    %v378 = vld [vmem:[%s4 + $0xb0] sm:$0xff]
    %v379 = vld [vmem:[%s4 + $0xb8] sm:$0xff]
    %v380 = vld [vmem:[%s4 + $0xc0] sm:$0xff]
    %v381 = vld [vmem:[%s4 + $0xc8] sm:$0xff]
    %v382 = vld [vmem:[%s4 + $0xd0] sm:$0xff]
    %v383 = vld [vmem:[%s4 + $0xd8] sm:$0xff]
    %v384 = vld [vmem:[%s4 + $0xe0] sm:$0xff]
    %v385 = vld [vmem:[%s4 + $0xe8] sm:$0xff]
    %v386 = vld [vmem:[%s4 + $0xf0] sm:$0xff]
    %v387 = vld [vmem:[%s4 + $0xf8] sm:$0xff]
    %v388 = vld [vmem:[%s4 + $0x100] sm:$0xff]
    %v389 = vld [vmem:[%s4 + $0x108] sm:$0xff]
    %v390 = vld [vmem:[%s4 + $0x110] sm:$0xff]
    %v391 = vld [vmem:[%s4 + $0x118] sm:$0xff]
    %v392 = vld [vmem:[%s4 + $0x120] sm:$0xff]
    %v393 = vld [vmem:[%s4 + $0x128] sm:$0xff]
    %v394 = vld [vmem:[%s4 + $0x130] sm:$0xff]
    %v395 = vld [vmem:[%s4 + $0x138] sm:$0xff]
    %v396 = vld [vmem:[%s4 + $0x140] sm:$0xff]
    %v397 = vld [vmem:[%s4 + $0x148] sm:$0xff]
    %v398 = vld [vmem:[%s4 + $0x150] sm:$0xff]
    %v399 = vld [vmem:[%s4 + $0x158] sm:$0xff]
    %v400 = vld [vmem:[%s4 + $0x160] sm:$0xff]
    %v401 = vld [vmem:[%s4 + $0x168] sm:$0xff]
    %v402 = vld [vmem:[%s4 + $0x170] sm:$0xff]
    %v403 = vld [vmem:[%s4 + $0x178] sm:$0xff]
    %v404 = vld [vmem:[%s5] sm:$0x3]
    %v406 = vperm.slane %v404, 0
    %v407 = vperm.slane %v404, 1
    %v458 = vunpack.c.l.b16 %v356
    %v459 = vunpack.c.h.b16 %v356
    %v460 = vunpack.c.l.b16 %v357
    %v461 = vunpack.c.h.b16 %v357
    %v462 = vunpack.c.l.b16 %v358
    %v463 = vunpack.c.h.b16 %v358
    %v464 = vunpack.c.l.b16 %v359
    %v465 = vunpack.c.h.b16 %v359
    %v466 = vunpack.c.l.b16 %v360
    %v467 = vunpack.c.h.b16 %v360
    %v468 = vunpack.c.l.b16 %v361
    %v469 = vunpack.c.h.b16 %v361
    %v470 = vunpack.c.l.b16 %v362
    %v471 = vunpack.c.h.b16 %v362
    %v472 = vunpack.c.l.b16 %v363
    %v473 = vunpack.c.h.b16 %v363
    %v474 = vunpack.c.l.b16 %v364
    %v475 = vunpack.c.h.b16 %v364
    %v476 = vunpack.c.l.b16 %v365
    %v477 = vunpack.c.h.b16 %v365
    %v478 = vunpack.c.l.b16 %v366
    %v479 = vunpack.c.h.b16 %v366
    %v480 = vunpack.c.l.b16 %v367
    %v481 = vunpack.c.h.b16 %v367
    %v482 = vunpack.c.l.b16 %v368
    %v483 = vunpack.c.h.b16 %v368
    %v484 = vunpack.c.l.b16 %v369
    %v485 = vunpack.c.h.b16 %v369
    %v486 = vunpack.c.l.b16 %v370
    %v487 = vunpack.c.h.b16 %v370
    %v488 = vunpack.c.l.b16 %v371
    %v489 = vunpack.c.h.b16 %v371
    %v490 = vunpack.c.l.b16 %v372
    %v491 = vunpack.c.h.b16 %v372
    %v492 = vunpack.c.l.b16 %v373
    %v493 = vunpack.c.h.b16 %v373
    %v494 = vunpack.c.l.b16 %v374
    %v495 = vunpack.c.h.b16 %v374
    %v496 = vunpack.c.l.b16 %v375
    %v497 = vunpack.c.h.b16 %v375
    %v498 = vunpack.c.l.b16 %v376
    %v499 = vunpack.c.h.b16 %v376
    %v500 = vunpack.c.l.b16 %v377
    %v501 = vunpack.c.h.b16 %v377
    %v502 = vunpack.c.l.b16 %v378
    %v503 = vunpack.c.h.b16 %v378
    %v504 = vunpack.c.l.b16 %v379
    %v505 = vunpack.c.h.b16 %v379
    %v506 = vunpack.c.l.b16 %v380
    %v507 = vunpack.c.h.b16 %v380
    %v508 = vunpack.c.l.b16 %v381
    %v509 = vunpack.c.h.b16 %v381
    %v510 = vunpack.c.l.b16 %v382
    %v511 = vunpack.c.h.b16 %v382
    %v512 = vunpack.c.l.b16 %v383
    %v513 = vunpack.c.h.b16 %v383
    %v514 = vunpack.c.l.b16 %v384
    %v515 = vunpack.c.h.b16 %v384
    %v516 = vunpack.c.l.b16 %v385
    %v517 = vunpack.c.h.b16 %v385
    %v518 = vunpack.c.l.b16 %v386
    %v519 = vunpack.c.h.b16 %v386
    %v520 = vunpack.c.l.b16 %v387
    %v521 = vunpack.c.h.b16 %v387
    %v522 = vunpack.c.l.b16 %v388
    %v523 = vunpack.c.h.b16 %v388
    %v524 = vunpack.c.l.b16 %v389
    %v525 = vunpack.c.h.b16 %v389
    %v526 = vunpack.c.l.b16 %v390
    %v527 = vunpack.c.h.b16 %v390
    %v528 = vunpack.c.l.b16 %v391
    %v529 = vunpack.c.h.b16 %v391
    %v530 = vunpack.c.l.b16 %v392
    %v531 = vunpack.c.h.b16 %v392
    %v532 = vunpack.c.l.b16 %v393
    %v533 = vunpack.c.h.b16 %v393
    %v534 = vunpack.c.l.b16 %v394
    %v535 = vunpack.c.h.b16 %v394
    %v536 = vunpack.c.l.b16 %v395
    %v537 = vunpack.c.h.b16 %v395
    %v538 = vunpack.c.l.b16 %v396
    %v539 = vunpack.c.h.b16 %v396
    %v540 = vunpack.c.l.b16 %v397
    %v541 = vunpack.c.h.b16 %v397
    %v542 = vunpack.c.l.b16 %v398
    %v543 = vunpack.c.h.b16 %v398
    %v544 = vunpack.c.l.b16 %v399
    %v545 = vunpack.c.h.b16 %v399
    %v546 = vunpack.c.l.b16 %v400
    %v547 = vunpack.c.h.b16 %v400
    %v548 = vunpack.c.l.b16 %v401
    %v549 = vunpack.c.h.b16 %v401
    %v550 = vunpack.c.l.b16 %v402
    %v551 = vunpack.c.h.b16 %v402
    %v552 = vunpack.c.l.b16 %v403
    %v553 = vunpack.c.h.b16 %v403
    %v554 = vpack.c.b16 %v460, %v458
    %v555 = vpack.c.b16 %v461, %v459
    %v556 = vpack.c.b16 %v464, %v462
    %v557 = vpack.c.b16 %v465, %v463
    %v558 = vpack.c.b16 %v468, %v466
    %v559 = vpack.c.b16 %v469, %v467
    %v560 = vpack.c.b16 %v472, %v470
    %v561 = vpack.c.b16 %v473, %v471
    %v562 = vpack.c.b16 %v476, %v474
    %v563 = vpack.c.b16 %v477, %v475
    %v564 = vpack.c.b16 %v480, %v478
    %v565 = vpack.c.b16 %v481, %v479
    %v566 = vpack.c.b16 %v484, %v482
    %v567 = vpack.c.b16 %v485, %v483
    %v568 = vpack.c.b16 %v488, %v486
    %v569 = vpack.c.b16 %v489, %v487
    %v570 = vpack.c.b16 %v492, %v490
    %v571 = vpack.c.b16 %v493, %v491
    %v572 = vpack.c.b16 %v496, %v494
    %v573 = vpack.c.b16 %v497, %v495
    %v574 = vpack.c.b16 %v500, %v498
    %v575 = vpack.c.b16 %v501, %v499
    %v576 = vpack.c.b16 %v504, %v502
    %v577 = vpack.c.b16 %v505, %v503
    %v578 = vpack.c.b16 %v508, %v506
    %v579 = vpack.c.b16 %v509, %v507
    %v580 = vpack.c.b16 %v512, %v510
    %v581 = vpack.c.b16 %v513, %v511
    %v582 = vpack.c.b16 %v516, %v514
    %v583 = vpack.c.b16 %v517, %v515
    %v584 = vpack.c.b16 %v520, %v518
    %v585 = vpack.c.b16 %v521, %v519
    %v586 = vpack.c.b16 %v524, %v522
    %v587 = vpack.c.b16 %v525, %v523
    %v588 = vpack.c.b16 %v528, %v526
    %v589 = vpack.c.b16 %v529, %v527
    %v590 = vpack.c.b16 %v532, %v530
    %v591 = vpack.c.b16 %v533, %v531
    %v592 = vpack.c.b16 %v536, %v534
    %v593 = vpack.c.b16 %v537, %v535
    %v594 = vpack.c.b16 %v540, %v538
    %v595 = vpack.c.b16 %v541, %v539
    %v596 = vpack.c.b16 %v544, %v542
    %v597 = vpack.c.b16 %v545, %v543
    %v598 = vpack.c.b16 %v548, %v546
    %v599 = vpack.c.b16 %v549, %v547
    %v600 = vpack.c.b16 %v552, %v550
    %v601 = vpack.c.b16 %v553, %v551
    %650 = vmatpush.bf16.msra.mxu0 %v568
    %651 = vmatpush.bf16.msra.mxu0 %v566
    %652 = vmatpush.bf16.msra.mxu0 %v564
    %653 = vmatpush.bf16.msra.mxu0 %v562
    %654 = vmatpush.bf16.msra.mxu0 %v560
    %655 = vmatpush.bf16.msra.mxu0 %v558
    %656 = vmatpush.bf16.msra.mxu0 %v556
    %657 = vmatpush.bf16.msra.mxu0 %v554
    %658 = vmatmul.bf16.gmra.mxu0 %v350
    %v659 = vpop.f32.mrf.mxu0
    %v660 = vadd.f32 %v406, %v659
    %v661 = vpop.f32.mrf.mxu0
    %v662 = vadd.f32 %v406, %v661
    %663 = vmatmul.bf16.gmra.mxu0 %v353
    %v664 = vpop.f32.mrf.mxu0
    %v665 = vadd.f32 %v406, %v664
    %v666 = vpop.f32.mrf.mxu0
    %v667 = vadd.f32 %v406, %v666
    %668 = vdwg.mxu0
    %669 = vmatpush.bf16.msra.mxu0 %v584
    %670 = vmatpush.bf16.msra.mxu0 %v582
    %671 = vmatpush.bf16.msra.mxu0 %v580
    %672 = vmatpush.bf16.msra.mxu0 %v578
    %673 = vmatpush.bf16.msra.mxu0 %v576
    %674 = vmatpush.bf16.msra.mxu0 %v574
    %675 = vmatpush.bf16.msra.mxu0 %v572
    %676 = vmatpush.bf16.msra.mxu0 %v570
    %677 = vmatmul.bf16.gmra.mxu0 %v351
    %v678 = vpop.f32.mrf.mxu0
    %v679 = vadd.f32 %v660, %v678
    %v680 = vpop.f32.mrf.mxu0
    %v681 = vadd.f32 %v662, %v680
    %682 = vmatmul.bf16.gmra.mxu0 %v354
    %v683 = vpop.f32.mrf.mxu0
    %v684 = vadd.f32 %v665, %v683
    %v685 = vpop.f32.mrf.mxu0
    %v686 = vadd.f32 %v667, %v685
    %687 = vdwg.mxu0
    %688 = vmatpush.bf16.msra.mxu0 %v600
    %689 = vmatpush.bf16.msra.mxu0 %v598
    %690 = vmatpush.bf16.msra.mxu0 %v596
    %691 = vmatpush.bf16.msra.mxu0 %v594
    %692 = vmatpush.bf16.msra.mxu0 %v592
    %693 = vmatpush.bf16.msra.mxu0 %v590
    %694 = vmatpush.bf16.msra.mxu0 %v588
    %695 = vmatpush.bf16.msra.mxu0 %v586
    %696 = vmatmul.bf16.gmra.mxu0 %v352
    %v697 = vpop.f32.mrf.mxu0
    %v698 = vadd.f32 %v679, %v697
    %v699 = vpop.f32.mrf.mxu0
    %v700 = vadd.f32 %v681, %v699
    %701 = vmatmul.bf16.gmra.mxu0 %v355
    %v702 = vpop.f32.mrf.mxu0
    %v703 = vadd.f32 %v684, %v702
    %v704 = vpop.f32.mrf.mxu0
    %v705 = vadd.f32 %v686, %v704
    %706 = vdwg.mxu0
    %707 = vmatpush.bf16.msra.mxu0 %v569
    %708 = vmatpush.bf16.msra.mxu0 %v567
    %709 = vmatpush.bf16.msra.mxu0 %v565
    %710 = vmatpush.bf16.msra.mxu0 %v563
    %711 = vmatpush.bf16.msra.mxu0 %v561
    %712 = vmatpush.bf16.msra.mxu0 %v559
    %713 = vmatpush.bf16.msra.mxu0 %v557
    %714 = vmatpush.bf16.msra.mxu0 %v555
    %715 = vmatmul.bf16.gmra.mxu0 %v350
    %v716 = vpop.f32.mrf.mxu0
    %v717 = vadd.f32 %v407, %v716
    %v718 = vpop.f32.mrf.mxu0
    %v719 = vadd.f32 %v407, %v718
    %720 = vmatmul.bf16.gmra.mxu0 %v353
    %v721 = vpop.f32.mrf.mxu0
    %v722 = vadd.f32 %v407, %v721
    %v723 = vpop.f32.mrf.mxu0
    %v724 = vadd.f32 %v407, %v723
    %725 = vdwg.mxu0
    %726 = vmatpush.bf16.msra.mxu0 %v585
    %727 = vmatpush.bf16.msra.mxu0 %v583
    %728 = vmatpush.bf16.msra.mxu0 %v581
    %729 = vmatpush.bf16.msra.mxu0 %v579
    %730 = vmatpush.bf16.msra.mxu0 %v577
    %731 = vmatpush.bf16.msra.mxu0 %v575
    %732 = vmatpush.bf16.msra.mxu0 %v573
    %733 = vmatpush.bf16.msra.mxu0 %v571
    %734 = vmatmul.bf16.gmra.mxu0 %v351
    %v735 = vpop.f32.mrf.mxu0
    %v736 = vadd.f32 %v717, %v735
    %v737 = vpop.f32.mrf.mxu0
    %v738 = vadd.f32 %v719, %v737
    %739 = vmatmul.bf16.gmra.mxu0 %v354
    %v740 = vpop.f32.mrf.mxu0
    %v741 = vadd.f32 %v722, %v740
    %v742 = vpop.f32.mrf.mxu0
    %v743 = vadd.f32 %v724, %v742
    %744 = vdwg.mxu0
    %745 = vmatpush.bf16.msra.mxu0 %v601
    %746 = vmatpush.bf16.msra.mxu0 %v599
    %747 = vmatpush.bf16.msra.mxu0 %v597
    %748 = vmatpush.bf16.msra.mxu0 %v595
    %749 = vmatpush.bf16.msra.mxu0 %v593
    %750 = vmatpush.bf16.msra.mxu0 %v591
    %751 = vmatpush.bf16.msra.mxu0 %v589
    %752 = vmatpush.bf16.msra.mxu0 %v587
    %753 = vmatmul.bf16.gmra.mxu0 %v352
    %v754 = vpop.f32.mrf.mxu0
    %v755 = vadd.f32 %v736, %v754
    %v756 = vpop.f32.mrf.mxu0
    %v757 = vadd.f32 %v738, %v756
    %758 = vmatmul.bf16.gmra.mxu0 %v355
    %v759 = vpop.f32.mrf.mxu0
    %v760 = vadd.f32 %v741, %v759
    %v761 = vpop.f32.mrf.mxu0
    %v762 = vadd.f32 %v743, %v761
    %763 = vdwg.mxu0
    %v764 = vmax.f32 %v698, 0.0
    %v765 = vmax.f32 %v755, 0.0
    %v766 = vmax.f32 %v700, 0.0
    %v767 = vmax.f32 %v757, 0.0
    %v768 = vmax.f32 %v703, 0.0
    %v769 = vmax.f32 %v760, 0.0
    %v770 = vmax.f32 %v705, 0.0
    %v771 = vmax.f32 %v762, 0.0
    %v772 = vmax.f32 %v764, %v765
    %v773 = vmax.f32 %v766, %v767
    %v774 = vmax.f32 %v768, %v769
    %v775 = vmax.f32 %v770, %v771
    %v776 = vrot.slane %v772, 1
    %v777 = vrot.slane %v773, 1
    %v778 = vrot.slane %v774, 1
    %v779 = vrot.slane %v775, 1
    %v780 = vsel %vm272, %v778, %v779
    %v781 = vsel %vm272, %v777, %v778
    %v782 = vsel %vm272, %v776, %v777
    %v783 = vsel %vm272, %v779, %v776
    %v784 = vmax.f32 %v772, %v782
    %v785 = vmax.f32 %v773, %v781
    %v786 = vmax.f32 %v774, %v780
    %v787 = vmax.f32 %v775, %v783
    %v788 = vpack.c.bf16 %v785, %v784
    %v789 = vpack.c.bf16 %v787, %v786
    %v790 = vld [vmem:[%s6] sm:$0x1]
    %vm791 = vcmask 261120
    %v793 = vsel %vm791, %v790, 0
    %795 = vmatpush.bf16.msra.mxu0 0
    %796 = vmatpush.bf16.msra.mxu0 0
    %797 = vmatpush.bf16.msra.mxu0 0
    %798 = vmatpush.bf16.msra.mxu0 0
    %799 = vmatpush.bf16.msra.mxu0 0
    %800 = vmatpush.bf16.msra.mxu0 0
    %801 = vmatpush.bf16.msra.mxu0 %v789
    %802 = vmatpush.bf16.msra.mxu0 %v788
    %803 = vmatmul.bf16.gmra.mxu0 %v793
    %v804 = vpop.f32.mrf.mxu0
    %v805 = vadd.f32 0.0, %v804
    %v806 = vpop.f32.mrf.mxu0
    %807 = vdwg.mxu0
    %s808 = scalar_lea.vmem %s6, 1
    %v809 = vld [vmem:[%s808] sm:$0x1]
    %v811 = vsel %vm791, %v809, 0
    %813 = vmatpush.bf16.msra.mxu0 0
    %814 = vmatpush.bf16.msra.mxu0 0
    %815 = vmatpush.bf16.msra.mxu0 0
    %816 = vmatpush.bf16.msra.mxu0 0
    %817 = vmatpush.bf16.msra.mxu0 0
    %818 = vmatpush.bf16.msra.mxu0 0
    %819 = vmatpush.bf16.msra.mxu0 %v789
    %820 = vmatpush.bf16.msra.mxu0 %v788
    %821 = vmatmul.bf16.gmra.mxu0 %v811
    %v822 = vpop.f32.mrf.mxu0
    %v823 = vadd.f32 0.0, %v822
    %v824 = vpop.f32.mrf.mxu0
    %825 = vdwg.mxu0
    %s826 = scalar_lea.vmem %s6, 2
    %v827 = vld [vmem:[%s826] sm:$0x1]
    %v829 = vsel %vm791, %v827, 0
    %831 = vmatpush.bf16.msra.mxu0 0
    %832 = vmatpush.bf16.msra.mxu0 0
    %833 = vmatpush.bf16.msra.mxu0 0
    %834 = vmatpush.bf16.msra.mxu0 0
    %835 = vmatpush.bf16.msra.mxu0 0
    %836 = vmatpush.bf16.msra.mxu0 0
    %837 = vmatpush.bf16.msra.mxu0 %v789
    %838 = vmatpush.bf16.msra.mxu0 %v788
    %839 = vmatmul.bf16.gmra.mxu0 %v829
    %v840 = vpop.f32.mrf.mxu0
    %v841 = vadd.f32 0.0, %v840
    %v842 = vpop.f32.mrf.mxu0
    %843 = vdwg.mxu0
    %s844 = scalar_lea.vmem %s6, 3
    %v845 = vld [vmem:[%s844] sm:$0x1]
    %v847 = vsel %vm791, %v845, 0
    %849 = vmatpush.bf16.msra.mxu0 0
    %850 = vmatpush.bf16.msra.mxu0 0
    %851 = vmatpush.bf16.msra.mxu0 0
    %852 = vmatpush.bf16.msra.mxu0 0
    %853 = vmatpush.bf16.msra.mxu0 0
    %854 = vmatpush.bf16.msra.mxu0 0
    %855 = vmatpush.bf16.msra.mxu0 %v789
    %856 = vmatpush.bf16.msra.mxu0 %v788
    %857 = vmatmul.bf16.gmra.mxu0 %v847
    %v858 = vpop.f32.mrf.mxu0
    %v859 = vadd.f32 0.0, %v858
    %v860 = vpop.f32.mrf.mxu0
    %861 = vdwg.mxu0
    %s862 = scalar_lea.vmem %s6, 4
    %v863 = vld [vmem:[%s862] sm:$0x1]
    %v865 = vsel %vm791, %v863, 0
    %867 = vmatpush.bf16.msra.mxu0 0
    %868 = vmatpush.bf16.msra.mxu0 0
    %869 = vmatpush.bf16.msra.mxu0 0
    %870 = vmatpush.bf16.msra.mxu0 0
    %871 = vmatpush.bf16.msra.mxu0 0
    %872 = vmatpush.bf16.msra.mxu0 0
    %873 = vmatpush.bf16.msra.mxu0 %v789
    %874 = vmatpush.bf16.msra.mxu0 %v788
    %875 = vmatmul.bf16.gmra.mxu0 %v865
    %v876 = vpop.f32.mrf.mxu0
    %v877 = vadd.f32 0.0, %v876
    %v878 = vpop.f32.mrf.mxu0
    %879 = vdwg.mxu0
    %s880 = scalar_lea.vmem %s6, 5
    %v881 = vld [vmem:[%s880] sm:$0x1]
    %v883 = vsel %vm791, %v881, 0
    %885 = vmatpush.bf16.msra.mxu0 0
    %886 = vmatpush.bf16.msra.mxu0 0
    %887 = vmatpush.bf16.msra.mxu0 0
    %888 = vmatpush.bf16.msra.mxu0 0
    %889 = vmatpush.bf16.msra.mxu0 0
    %890 = vmatpush.bf16.msra.mxu0 0
    %891 = vmatpush.bf16.msra.mxu0 %v789
    %892 = vmatpush.bf16.msra.mxu0 %v788
    %893 = vmatmul.bf16.gmra.mxu0 %v883
    %v894 = vpop.f32.mrf.mxu0
    %v895 = vadd.f32 0.0, %v894
    %v896 = vpop.f32.mrf.mxu0
    %897 = vdwg.mxu0
    %v898 = vpack.c.bf16 %v805, %v805
    %v899 = vpack.c.bf16 %v823, %v823
    %v900 = vpack.c.bf16 %v841, %v841
    %v901 = vpack.c.bf16 %v859, %v859
    %v902 = vpack.c.bf16 %v877, %v877
    %v903 = vpack.c.bf16 %v895, %v895
    %v904 = vld [vmem:[%s7] sm:$0xf]
    %v905 = vld [vmem:[%s7 + $0x4] sm:$0xf]
    %v906 = vld [vmem:[%s7 + $0x8] sm:$0xf]
    %v907 = vld [vmem:[%s7 + $0xc] sm:$0xf]
    %v908 = vld [vmem:[%s7 + $0x10] sm:$0xf]
    %v909 = vld [vmem:[%s7 + $0x14] sm:$0xf]
    %v910 = vld [vmem:[%s7 + $0x18] sm:$0xf]
    %v911 = vld [vmem:[%s7 + $0x1c] sm:$0xf]
    %v912 = vld [vmem:[%s7 + $0x20] sm:$0xf]
    %v913 = vld [vmem:[%s7 + $0x24] sm:$0xf]
    %v914 = vld [vmem:[%s7 + $0x28] sm:$0xf]
    %v915 = vld [vmem:[%s7 + $0x2c] sm:$0xf]
    %v916 = vld [vmem:[%s7 + $0x30] sm:$0xf]
    %v917 = vld [vmem:[%s7 + $0x34] sm:$0xf]
    %v918 = vld [vmem:[%s7 + $0x38] sm:$0xf]
    %v919 = vld [vmem:[%s7 + $0x3c] sm:$0xf]
    %v920 = vld [vmem:[%s7 + $0x40] sm:$0xf]
    %v921 = vld [vmem:[%s7 + $0x44] sm:$0xf]
    %v922 = vld [vmem:[%s7 + $0x48] sm:$0xf]
    %v923 = vld [vmem:[%s7 + $0x4c] sm:$0xf]
    %v924 = vld [vmem:[%s7 + $0x50] sm:$0xf]
    %v925 = vld [vmem:[%s7 + $0x54] sm:$0xf]
    %v926 = vld [vmem:[%s7 + $0x58] sm:$0xf]
    %v927 = vld [vmem:[%s7 + $0x5c] sm:$0xf]
    %v928 = vld [vmem:[%s7 + $0x60] sm:$0xf]
    %v929 = vld [vmem:[%s7 + $0x64] sm:$0xf]
    %v930 = vld [vmem:[%s7 + $0x68] sm:$0xf]
    %v931 = vld [vmem:[%s7 + $0x6c] sm:$0xf]
    %v932 = vld [vmem:[%s7 + $0x70] sm:$0xf]
    %v933 = vld [vmem:[%s7 + $0x74] sm:$0xf]
    %v934 = vld [vmem:[%s7 + $0x78] sm:$0xf]
    %v935 = vld [vmem:[%s7 + $0x7c] sm:$0xf]
    %v936 = vld [vmem:[%s7 + $0x80] sm:$0xf]
    %v937 = vld [vmem:[%s7 + $0x84] sm:$0xf]
    %v938 = vld [vmem:[%s7 + $0x88] sm:$0xf]
    %v939 = vld [vmem:[%s7 + $0x8c] sm:$0xf]
    %v940 = vld [vmem:[%s7 + $0x90] sm:$0xf]
    %v941 = vld [vmem:[%s7 + $0x94] sm:$0xf]
    %v942 = vld [vmem:[%s7 + $0x98] sm:$0xf]
    %v943 = vld [vmem:[%s7 + $0x9c] sm:$0xf]
    %v944 = vld [vmem:[%s7 + $0xa0] sm:$0xf]
    %v945 = vld [vmem:[%s7 + $0xa4] sm:$0xf]
    %v946 = vld [vmem:[%s7 + $0xa8] sm:$0xf]
    %v947 = vld [vmem:[%s7 + $0xac] sm:$0xf]
    %v948 = vld [vmem:[%s7 + $0xb0] sm:$0xf]
    %v949 = vld [vmem:[%s7 + $0xb4] sm:$0xf]
    %v950 = vld [vmem:[%s7 + $0xb8] sm:$0xf]
    %v951 = vld [vmem:[%s7 + $0xbc] sm:$0xf]
    %v952 = vld [vmem:[%s7 + $0xc0] sm:$0xf]
    %v953 = vld [vmem:[%s7 + $0xc4] sm:$0xf]
    %v954 = vld [vmem:[%s7 + $0xc8] sm:$0xf]
    %v955 = vld [vmem:[%s7 + $0xcc] sm:$0xf]
    %v956 = vld [vmem:[%s7 + $0xd0] sm:$0xf]
    %v957 = vld [vmem:[%s7 + $0xd4] sm:$0xf]
    %v958 = vld [vmem:[%s7 + $0xd8] sm:$0xf]
    %v959 = vld [vmem:[%s7 + $0xdc] sm:$0xf]
    %v960 = vld [vmem:[%s7 + $0xe0] sm:$0xf]
    %v961 = vld [vmem:[%s7 + $0xe4] sm:$0xf]
    %v962 = vld [vmem:[%s7 + $0xe8] sm:$0xf]
    %v963 = vld [vmem:[%s7 + $0xec] sm:$0xf]
    %v964 = vld [vmem:[%s7 + $0xf0] sm:$0xf]
    %v965 = vld [vmem:[%s7 + $0xf4] sm:$0xf]
    %v966 = vld [vmem:[%s7 + $0xf8] sm:$0xf]
    %v967 = vld [vmem:[%s7 + $0xfc] sm:$0xf]
    %v968 = vld [vmem:[%s7 + $0x100] sm:$0xf]
    %v969 = vld [vmem:[%s7 + $0x104] sm:$0xf]
    %v970 = vld [vmem:[%s7 + $0x108] sm:$0xf]
    %v971 = vld [vmem:[%s7 + $0x10c] sm:$0xf]
    %v972 = vld [vmem:[%s7 + $0x110] sm:$0xf]
    %v973 = vld [vmem:[%s7 + $0x114] sm:$0xf]
    %v974 = vld [vmem:[%s7 + $0x118] sm:$0xf]
    %v975 = vld [vmem:[%s7 + $0x11c] sm:$0xf]
    %v976 = vld [vmem:[%s7 + $0x120] sm:$0xf]
    %v977 = vld [vmem:[%s7 + $0x124] sm:$0xf]
    %v978 = vld [vmem:[%s7 + $0x128] sm:$0xf]
    %v979 = vld [vmem:[%s7 + $0x12c] sm:$0xf]
    %v980 = vld [vmem:[%s7 + $0x130] sm:$0xf]
    %v981 = vld [vmem:[%s7 + $0x134] sm:$0xf]
    %v982 = vld [vmem:[%s7 + $0x138] sm:$0xf]
    %v983 = vld [vmem:[%s7 + $0x13c] sm:$0xf]
    %v984 = vld [vmem:[%s7 + $0x140] sm:$0xf]
    %v985 = vld [vmem:[%s7 + $0x144] sm:$0xf]
    %v986 = vld [vmem:[%s7 + $0x148] sm:$0xf]
    %v987 = vld [vmem:[%s7 + $0x14c] sm:$0xf]
    %v988 = vld [vmem:[%s7 + $0x150] sm:$0xf]
    %v989 = vld [vmem:[%s7 + $0x154] sm:$0xf]
    %v990 = vld [vmem:[%s7 + $0x158] sm:$0xf]
    %v991 = vld [vmem:[%s7 + $0x15c] sm:$0xf]
    %v992 = vld [vmem:[%s7 + $0x160] sm:$0xf]
    %v993 = vld [vmem:[%s7 + $0x164] sm:$0xf]
    %v994 = vld [vmem:[%s7 + $0x168] sm:$0xf]
    %v995 = vld [vmem:[%s7 + $0x16c] sm:$0xf]
    %v996 = vld [vmem:[%s7 + $0x170] sm:$0xf]
    %v997 = vld [vmem:[%s7 + $0x174] sm:$0xf]
    %v998 = vld [vmem:[%s7 + $0x178] sm:$0xf]
    %v999 = vld [vmem:[%s7 + $0x17c] sm:$0xf]
    %v1000 = vld [vmem:[%s8] sm:$0x1]
    %v1002 = vperm.slane %v1000, 0
    %v1100 = vunpack.c.l.b16 %v904
    %v1101 = vunpack.c.l.b16 %v905
    %v1102 = vunpack.c.l.b16 %v906
    %v1103 = vunpack.c.l.b16 %v907
    %v1104 = vunpack.c.l.b16 %v908
    %v1105 = vunpack.c.l.b16 %v909
    %v1106 = vunpack.c.l.b16 %v910
    %v1107 = vunpack.c.l.b16 %v911
    %v1108 = vunpack.c.l.b16 %v912
    %v1109 = vunpack.c.l.b16 %v913
    %v1110 = vunpack.c.l.b16 %v914
    %v1111 = vunpack.c.l.b16 %v915
    %v1112 = vunpack.c.l.b16 %v916
    %v1113 = vunpack.c.l.b16 %v917
    %v1114 = vunpack.c.l.b16 %v918
    %v1115 = vunpack.c.l.b16 %v919
    %v1116 = vunpack.c.l.b16 %v920
    %v1117 = vunpack.c.l.b16 %v921
    %v1118 = vunpack.c.l.b16 %v922
    %v1119 = vunpack.c.l.b16 %v923
    %v1120 = vunpack.c.l.b16 %v924
    %v1121 = vunpack.c.l.b16 %v925
    %v1122 = vunpack.c.l.b16 %v926
    %v1123 = vunpack.c.l.b16 %v927
    %v1124 = vunpack.c.l.b16 %v928
    %v1125 = vunpack.c.l.b16 %v929
    %v1126 = vunpack.c.l.b16 %v930
    %v1127 = vunpack.c.l.b16 %v931
    %v1128 = vunpack.c.l.b16 %v932
    %v1129 = vunpack.c.l.b16 %v933
    %v1130 = vunpack.c.l.b16 %v934
    %v1131 = vunpack.c.l.b16 %v935
    %v1132 = vunpack.c.l.b16 %v936
    %v1133 = vunpack.c.l.b16 %v937
    %v1134 = vunpack.c.l.b16 %v938
    %v1135 = vunpack.c.l.b16 %v939
    %v1136 = vunpack.c.l.b16 %v940
    %v1137 = vunpack.c.l.b16 %v941
    %v1138 = vunpack.c.l.b16 %v942
    %v1139 = vunpack.c.l.b16 %v943
    %v1140 = vunpack.c.l.b16 %v944
    %v1141 = vunpack.c.l.b16 %v945
    %v1142 = vunpack.c.l.b16 %v946
    %v1143 = vunpack.c.l.b16 %v947
    %v1144 = vunpack.c.l.b16 %v948
    %v1145 = vunpack.c.l.b16 %v949
    %v1146 = vunpack.c.l.b16 %v950
    %v1147 = vunpack.c.l.b16 %v951
    %v1148 = vunpack.c.l.b16 %v952
    %v1149 = vunpack.c.l.b16 %v953
    %v1150 = vunpack.c.l.b16 %v954
    %v1151 = vunpack.c.l.b16 %v955
    %v1152 = vunpack.c.l.b16 %v956
    %v1153 = vunpack.c.l.b16 %v957
    %v1154 = vunpack.c.l.b16 %v958
    %v1155 = vunpack.c.l.b16 %v959
    %v1156 = vunpack.c.l.b16 %v960
    %v1157 = vunpack.c.l.b16 %v961
    %v1158 = vunpack.c.l.b16 %v962
    %v1159 = vunpack.c.l.b16 %v963
    %v1160 = vunpack.c.l.b16 %v964
    %v1161 = vunpack.c.l.b16 %v965
    %v1162 = vunpack.c.l.b16 %v966
    %v1163 = vunpack.c.l.b16 %v967
    %v1164 = vunpack.c.l.b16 %v968
    %v1165 = vunpack.c.l.b16 %v969
    %v1166 = vunpack.c.l.b16 %v970
    %v1167 = vunpack.c.l.b16 %v971
    %v1168 = vunpack.c.l.b16 %v972
    %v1169 = vunpack.c.l.b16 %v973
    %v1170 = vunpack.c.l.b16 %v974
    %v1171 = vunpack.c.l.b16 %v975
    %v1172 = vunpack.c.l.b16 %v976
    %v1173 = vunpack.c.l.b16 %v977
    %v1174 = vunpack.c.l.b16 %v978
    %v1175 = vunpack.c.l.b16 %v979
    %v1176 = vunpack.c.l.b16 %v980
    %v1177 = vunpack.c.l.b16 %v981
    %v1178 = vunpack.c.l.b16 %v982
    %v1179 = vunpack.c.l.b16 %v983
    %v1180 = vunpack.c.l.b16 %v984
    %v1181 = vunpack.c.l.b16 %v985
    %v1182 = vunpack.c.l.b16 %v986
    %v1183 = vunpack.c.l.b16 %v987
    %v1184 = vunpack.c.l.b16 %v988
    %v1185 = vunpack.c.l.b16 %v989
    %v1186 = vunpack.c.l.b16 %v990
    %v1187 = vunpack.c.l.b16 %v991
    %v1188 = vunpack.c.l.b16 %v992
    %v1189 = vunpack.c.l.b16 %v993
    %v1190 = vunpack.c.l.b16 %v994
    %v1191 = vunpack.c.l.b16 %v995
    %v1192 = vunpack.c.l.b16 %v996
    %v1193 = vunpack.c.l.b16 %v997
    %v1194 = vunpack.c.l.b16 %v998
    %v1195 = vunpack.c.l.b16 %v999
    %v1196 = vpack.c.b16 %v1101, %v1100
    %v1197 = vpack.c.b16 %v1103, %v1102
    %v1198 = vpack.c.b16 %v1105, %v1104
    %v1199 = vpack.c.b16 %v1107, %v1106
    %v1200 = vpack.c.b16 %v1109, %v1108
    %v1201 = vpack.c.b16 %v1111, %v1110
    %v1202 = vpack.c.b16 %v1113, %v1112
    %v1203 = vpack.c.b16 %v1115, %v1114
    %v1204 = vpack.c.b16 %v1117, %v1116
    %v1205 = vpack.c.b16 %v1119, %v1118
    %v1206 = vpack.c.b16 %v1121, %v1120
    %v1207 = vpack.c.b16 %v1123, %v1122
    %v1208 = vpack.c.b16 %v1125, %v1124
    %v1209 = vpack.c.b16 %v1127, %v1126
    %v1210 = vpack.c.b16 %v1129, %v1128
    %v1211 = vpack.c.b16 %v1131, %v1130
    %v1212 = vpack.c.b16 %v1133, %v1132
    %v1213 = vpack.c.b16 %v1135, %v1134
    %v1214 = vpack.c.b16 %v1137, %v1136
    %v1215 = vpack.c.b16 %v1139, %v1138
    %v1216 = vpack.c.b16 %v1141, %v1140
    %v1217 = vpack.c.b16 %v1143, %v1142
    %v1218 = vpack.c.b16 %v1145, %v1144
    %v1219 = vpack.c.b16 %v1147, %v1146
    %v1220 = vpack.c.b16 %v1149, %v1148
    %v1221 = vpack.c.b16 %v1151, %v1150
    %v1222 = vpack.c.b16 %v1153, %v1152
    %v1223 = vpack.c.b16 %v1155, %v1154
    %v1224 = vpack.c.b16 %v1157, %v1156
    %v1225 = vpack.c.b16 %v1159, %v1158
    %v1226 = vpack.c.b16 %v1161, %v1160
    %v1227 = vpack.c.b16 %v1163, %v1162
    %v1228 = vpack.c.b16 %v1165, %v1164
    %v1229 = vpack.c.b16 %v1167, %v1166
    %v1230 = vpack.c.b16 %v1169, %v1168
    %v1231 = vpack.c.b16 %v1171, %v1170
    %v1232 = vpack.c.b16 %v1173, %v1172
    %v1233 = vpack.c.b16 %v1175, %v1174
    %v1234 = vpack.c.b16 %v1177, %v1176
    %v1235 = vpack.c.b16 %v1179, %v1178
    %v1236 = vpack.c.b16 %v1181, %v1180
    %v1237 = vpack.c.b16 %v1183, %v1182
    %v1238 = vpack.c.b16 %v1185, %v1184
    %v1239 = vpack.c.b16 %v1187, %v1186
    %v1240 = vpack.c.b16 %v1189, %v1188
    %v1241 = vpack.c.b16 %v1191, %v1190
    %v1242 = vpack.c.b16 %v1193, %v1192
    %v1243 = vpack.c.b16 %v1195, %v1194
    %1292 = vmatpush.bf16.msra.mxu0 %v1203
    %1293 = vmatpush.bf16.msra.mxu0 %v1202
    %1294 = vmatpush.bf16.msra.mxu0 %v1201
    %1295 = vmatpush.bf16.msra.mxu0 %v1200
    %1296 = vmatpush.bf16.msra.mxu0 %v1199
    %1297 = vmatpush.bf16.msra.mxu0 %v1198
    %1298 = vmatpush.bf16.msra.mxu0 %v1197
    %1299 = vmatpush.bf16.msra.mxu0 %v1196
    %1300 = vmatmul.bf16.gmra.mxu0 %v898
    %v1301 = vpop.f32.mrf.mxu0
    %v1302 = vadd.f32 %v1002, %v1301
    %v1303 = vpop.f32.mrf.mxu0
    %1304 = vdwg.mxu0
    %1305 = vmatpush.bf16.msra.mxu0 %v1211
    %1306 = vmatpush.bf16.msra.mxu0 %v1210
    %1307 = vmatpush.bf16.msra.mxu0 %v1209
    %1308 = vmatpush.bf16.msra.mxu0 %v1208
    %1309 = vmatpush.bf16.msra.mxu0 %v1207
    %1310 = vmatpush.bf16.msra.mxu0 %v1206
    %1311 = vmatpush.bf16.msra.mxu0 %v1205
    %1312 = vmatpush.bf16.msra.mxu0 %v1204
    %1313 = vmatmul.bf16.gmra.mxu0 %v899
    %v1314 = vpop.f32.mrf.mxu0
    %v1315 = vadd.f32 %v1302, %v1314
    %v1316 = vpop.f32.mrf.mxu0
    %1317 = vdwg.mxu0
    %1318 = vmatpush.bf16.msra.mxu0 %v1219
    %1319 = vmatpush.bf16.msra.mxu0 %v1218
    %1320 = vmatpush.bf16.msra.mxu0 %v1217
    %1321 = vmatpush.bf16.msra.mxu0 %v1216
    %1322 = vmatpush.bf16.msra.mxu0 %v1215
    %1323 = vmatpush.bf16.msra.mxu0 %v1214
    %1324 = vmatpush.bf16.msra.mxu0 %v1213
    %1325 = vmatpush.bf16.msra.mxu0 %v1212
    %1326 = vmatmul.bf16.gmra.mxu0 %v900
    %v1327 = vpop.f32.mrf.mxu0
    %v1328 = vadd.f32 %v1315, %v1327
    %v1329 = vpop.f32.mrf.mxu0
    %1330 = vdwg.mxu0
    %1331 = vmatpush.bf16.msra.mxu0 %v1227
    %1332 = vmatpush.bf16.msra.mxu0 %v1226
    %1333 = vmatpush.bf16.msra.mxu0 %v1225
    %1334 = vmatpush.bf16.msra.mxu0 %v1224
    %1335 = vmatpush.bf16.msra.mxu0 %v1223
    %1336 = vmatpush.bf16.msra.mxu0 %v1222
    %1337 = vmatpush.bf16.msra.mxu0 %v1221
    %1338 = vmatpush.bf16.msra.mxu0 %v1220
    %1339 = vmatmul.bf16.gmra.mxu0 %v901
    %v1340 = vpop.f32.mrf.mxu0
    %v1341 = vadd.f32 %v1328, %v1340
    %v1342 = vpop.f32.mrf.mxu0
    %1343 = vdwg.mxu0
    %1344 = vmatpush.bf16.msra.mxu0 %v1235
    %1345 = vmatpush.bf16.msra.mxu0 %v1234
    %1346 = vmatpush.bf16.msra.mxu0 %v1233
    %1347 = vmatpush.bf16.msra.mxu0 %v1232
    %1348 = vmatpush.bf16.msra.mxu0 %v1231
    %1349 = vmatpush.bf16.msra.mxu0 %v1230
    %1350 = vmatpush.bf16.msra.mxu0 %v1229
    %1351 = vmatpush.bf16.msra.mxu0 %v1228
    %1352 = vmatmul.bf16.gmra.mxu0 %v902
    %v1353 = vpop.f32.mrf.mxu0
    %v1354 = vadd.f32 %v1341, %v1353
    %v1355 = vpop.f32.mrf.mxu0
    %1356 = vdwg.mxu0
    %1357 = vmatpush.bf16.msra.mxu0 %v1243
    %1358 = vmatpush.bf16.msra.mxu0 %v1242
    %1359 = vmatpush.bf16.msra.mxu0 %v1241
    %1360 = vmatpush.bf16.msra.mxu0 %v1240
    %1361 = vmatpush.bf16.msra.mxu0 %v1239
    %1362 = vmatpush.bf16.msra.mxu0 %v1238
    %1363 = vmatpush.bf16.msra.mxu0 %v1237
    %1364 = vmatpush.bf16.msra.mxu0 %v1236
    %1365 = vmatmul.bf16.gmra.mxu0 %v903
    %v1366 = vpop.f32.mrf.mxu0
    %v1367 = vadd.f32 %v1354, %v1366
    %v1368 = vpop.f32.mrf.mxu0
    %1369 = vdwg.mxu0
    %v1370 = vmax.f32 %v1367, 0.0
    %v1371 = vpack.c.bf16 %v1370, %v1370
    %v1372 = vld [vmem:[%s9] sm:$0xf]
    %v1373 = vld [vmem:[%s9 + $0x4] sm:$0xf]
    %v1374 = vld [vmem:[%s9 + $0x8] sm:$0xf]
    %v1375 = vld [vmem:[%s9 + $0xc] sm:$0xf]
    %v1376 = vld [vmem:[%s9 + $0x10] sm:$0xf]
    %v1377 = vld [vmem:[%s9 + $0x14] sm:$0xf]
    %v1378 = vld [vmem:[%s9 + $0x18] sm:$0xf]
    %v1379 = vld [vmem:[%s9 + $0x1c] sm:$0xf]
    %v1380 = vld [vmem:[%s9 + $0x20] sm:$0xf]
    %v1381 = vld [vmem:[%s9 + $0x24] sm:$0xf]
    %v1382 = vld [vmem:[%s9 + $0x28] sm:$0xf]
    %v1383 = vld [vmem:[%s9 + $0x2c] sm:$0xf]
    %v1384 = vld [vmem:[%s9 + $0x30] sm:$0xf]
    %v1385 = vld [vmem:[%s9 + $0x34] sm:$0xf]
    %v1386 = vld [vmem:[%s9 + $0x38] sm:$0xf]
    %v1387 = vld [vmem:[%s10] sm:$0x1]
    %v1389 = vperm.slane %v1387, 0
    %v1406 = vunpack.c.l.b16 %v1372
    %v1407 = vunpack.c.l.b16 %v1373
    %v1408 = vunpack.c.l.b16 %v1374
    %v1409 = vunpack.c.l.b16 %v1375
    %v1410 = vunpack.c.l.b16 %v1376
    %v1411 = vunpack.c.l.b16 %v1377
    %v1412 = vunpack.c.l.b16 %v1378
    %v1413 = vunpack.c.l.b16 %v1379
    %v1414 = vunpack.c.l.b16 %v1380
    %v1415 = vunpack.c.l.b16 %v1381
    %v1416 = vunpack.c.l.b16 %v1382
    %v1417 = vunpack.c.l.b16 %v1383
    %v1418 = vunpack.c.l.b16 %v1384
    %v1419 = vunpack.c.l.b16 %v1385
    %v1420 = vunpack.c.l.b16 %v1386
    %v1421 = vpack.c.b16 %v1407, %v1406
    %v1422 = vpack.c.b16 %v1409, %v1408
    %v1423 = vpack.c.b16 %v1411, %v1410
    %v1424 = vpack.c.b16 %v1413, %v1412
    %v1425 = vpack.c.b16 %v1415, %v1414
    %v1426 = vpack.c.b16 %v1417, %v1416
    %v1427 = vpack.c.b16 %v1419, %v1418
    %v1428 = vpack.c.b16 %v1420, %v1420
    %vm1436 = vcmask 982016
    %v1438 = vsel %vm1436, %v1371, 0
    %vm1440 = vcmask 1043456
    %v1442 = vsel %vm1440, %v1428, 0
    %1444 = vmatpush.bf16.msra.mxu0 %v1442
    %1445 = vmatpush.bf16.msra.mxu0 %v1427
    %1446 = vmatpush.bf16.msra.mxu0 %v1426
    %1447 = vmatpush.bf16.msra.mxu0 %v1425
    %1448 = vmatpush.bf16.msra.mxu0 %v1424
    %1449 = vmatpush.bf16.msra.mxu0 %v1423
    %1450 = vmatpush.bf16.msra.mxu0 %v1422
    %1451 = vmatpush.bf16.msra.mxu0 %v1421
    %1452 = vmatmul.bf16.gmra.mxu0 %v1438
    %v1453 = vpop.f32.mrf.mxu0
    %v1454 = vadd.f32 %v1389, %v1453
    %v1455 = vpop.f32.mrf.mxu0
    %1456 = vdwg.mxu0
    %v1457 = vmax.f32 %v1454, 0.0
    %v1458 = vpack.c.bf16 %v1457, %v1457
    %v1459 = vld [vmem:[%s11] sm:$0xf]
    %v1460 = vld [vmem:[%s11 + $0x4] sm:$0xf]
    %v1461 = vld [vmem:[%s11 + $0x8] sm:$0xf]
    %v1462 = vld [vmem:[%s11 + $0xc] sm:$0xf]
    %v1463 = vld [vmem:[%s11 + $0x10] sm:$0xf]
    %v1464 = vld [vmem:[%s11 + $0x14] sm:$0xf]
    %v1465 = vld [vmem:[%s11 + $0x18] sm:$0xf]
    %v1466 = vld [vmem:[%s11 + $0x1c] sm:$0xf]
    %v1467 = vld [vmem:[%s11 + $0x20] sm:$0xf]
    %v1468 = vld [vmem:[%s11 + $0x24] sm:$0xf]
    %v1469 = vld [vmem:[%s11 + $0x28] sm:$0x3]
    %v1470 = vld [vmem:[%s12] sm:$0x1]
    %v1472 = vperm.slane %v1470, 0
    %v1485 = vunpack.c.l.b16 %v1459
    %v1486 = vunpack.c.l.b16 %v1460
    %v1487 = vunpack.c.l.b16 %v1461
    %v1488 = vunpack.c.l.b16 %v1462
    %v1489 = vunpack.c.l.b16 %v1463
    %v1490 = vunpack.c.l.b16 %v1464
    %v1491 = vunpack.c.l.b16 %v1465
    %v1492 = vunpack.c.l.b16 %v1466
    %v1493 = vunpack.c.l.b16 %v1467
    %v1494 = vunpack.c.l.b16 %v1468
    %v1495 = vunpack.c.l.b16 %v1469
    %v1496 = vpack.c.b16 %v1486, %v1485
    %v1497 = vpack.c.b16 %v1488, %v1487
    %v1498 = vpack.c.b16 %v1490, %v1489
    %v1499 = vpack.c.b16 %v1492, %v1491
    %v1500 = vpack.c.b16 %v1494, %v1493
    %v1501 = vpack.c.b16 %v1495, %v1495
    %vm1507 = vcmask 687104
    %v1509 = vsel %vm1507, %v1458, 0
    %vm1511 = vcmask 1041408
    %v1513 = vsel %vm1511, %v1501, 0
    %1515 = vmatpush.bf16.msra.mxu0 0
    %1516 = vmatpush.bf16.msra.mxu0 0
    %1517 = vmatpush.bf16.msra.mxu0 %v1513
    %1518 = vmatpush.bf16.msra.mxu0 %v1500
    %1519 = vmatpush.bf16.msra.mxu0 %v1499
    %1520 = vmatpush.bf16.msra.mxu0 %v1498
    %1521 = vmatpush.bf16.msra.mxu0 %v1497
    %1522 = vmatpush.bf16.msra.mxu0 %v1496
    %1523 = vmatmul.bf16.gmra.mxu0 %v1509
    %v1524 = vpop.f32.mrf.mxu0
    %v1525 = vadd.f32 %v1472, %v1524
    %v1526 = vpop.f32.mrf.mxu0
    %1527 = vdwg.mxu0
    %1528 = vst [vmem:[#allocation2] sm:$0x3] %v1525
    // Predicated region
    $region54: #{lenet_forward.1} parent=1 // pred_check
      _
    $region55: #{lenet_forward.1} parent=1 // pred_check_branch
      %1530 = sbr.rel (0) target = $region57
    $region56: #{lenet_forward.1} parent=1 // pred_region
      %1532 = vsyncadd [#allocation3], 0
      %s1534 = sshll.u32 [#allocation2], 4
      %s1535 = int_to_ptr.vmem [resolvable:$true] %s1534
      %s1536 = sshll.u32 %s13, 4
      %s1537 = int_to_ptr.hbm [resolvable:$true] %s1536
      %1539 = dma.vmem_to_hbm [thread:$0]  %s1535, 32, %s1537, [#allocation3]
    $region57: #{lenet_forward.1} parent=1 // pred_fallthru
      _
    // Predicated region
    $region58: #{lenet_forward.1} parent=1 // pred_check
      _
    $region59: #{lenet_forward.1} parent=1 // pred_check_branch
      %1541 = sbr.rel (0) target = $region61
    $region60: #{lenet_forward.1} parent=1 // pred_region
      %1543 = dma.done [#allocation3], 32
    $region61: #{lenet_forward.1} parent=1 // pred_fallthru
      _
    %1544 = vsyncpa [#allocation3], 1

</llo_original>
